<compile_context>
chip_gen: v7x
topology: tpu7x:2x2x1
jax: 0.10.0
libtpu: 0.0.40
codegen_flags: <defaults>
</compile_context>

<pallas_src>
from functools import partial

import jax
import jax.numpy as jnp
from jax.experimental import pallas as pl
from jax.experimental.pallas import tpu as pltpu

EPS = 1e-8
ALPHA, BETA, GAMMA = 1.0, 1.0, 0.001


# ----------------------------------------------------------------------------
# Kernel A: fused pointwise conv + pass-1 discriminative-loss statistics.
#   x_ref   : (Cin, T)          input activations tile (pixels in lanes)
#   gt_ref  : (N, T)            one-hot instance masks tile
#   wT_ref  : (E+1+nc, Cin)     conv weights, rows = [ins | ones | sem]
#   b_ref   : (E+1+nc, 1)       conv bias (the "ones" row has weight 0, bias 1)
#   ins_ref : (E, T)            instance-embedding output tile
#   sem_ref : (nc, T)           semantic-logit output tile
#   sums_ref: (E+1, N)          accumulator: rows 0..E-1 = sum_i gt*emb,
#                               row E = sum_i gt (per-cluster pixel counts)
# ----------------------------------------------------------------------------
def _conv_stats_kernel(x_ref, gt_ref, wT_ref, b_ref, ins_ref, sem_ref, sums_ref):
    @pl.when(pl.program_id(1) == 0)
    def _init():
        sums_ref[...] = jnp.zeros_like(sums_ref)

    n_emb = ins_ref.shape[0]
    out = (
        jnp.dot(wT_ref[...], x_ref[...], preferred_element_type=jnp.float32)
        + b_ref[...]
    )                                                    # (E+1+nc, T)
    ins_ref[...] = out[:n_emb, :]
    sem_ref[...] = out[n_emb + 1:, :]

    # [emb | ones] @ gt^T : contract over the pixel (lane) axis on the MXU.
    sums_ref[...] += jax.lax.dot_general(
        out[:n_emb + 1, :], gt_ref[...],
        (((1,), (1,)), ((), ())), preferred_element_type=jnp.float32)


def fused_conv_stats(x_l, gt_l, wT, b_col, n_classes, n_emb, hw_tile):
    B, c_in, HW = x_l.shape
    N = gt_l.shape[1]
    c_out = wT.shape[0]
    n_hw = HW // hw_tile
    return pl.pallas_call(
        _conv_stats_kernel,
        out_shape=(
            jax.ShapeDtypeStruct((B, n_emb, HW), jnp.float32),
            jax.ShapeDtypeStruct((B, n_classes, HW), jnp.float32),
            jax.ShapeDtypeStruct((B, n_emb + 1, N), jnp.float32),
        ),
        grid=(B, n_hw),
        in_specs=[
            pl.BlockSpec((None, c_in, hw_tile), lambda b, k: (b, 0, k)),
            pl.BlockSpec((None, N, hw_tile), lambda b, k: (b, 0, k)),
            pl.BlockSpec((c_out, c_in), lambda b, k: (0, 0)),
            pl.BlockSpec((c_out, 1), lambda b, k: (0, 0)),
        ],
        out_specs=(
            pl.BlockSpec((None, n_emb, hw_tile), lambda b, k: (b, 0, k)),
            pl.BlockSpec((None, n_classes, hw_tile), lambda b, k: (b, 0, k)),
            pl.BlockSpec((None, n_emb + 1, N), lambda b, k: (b, 0, 0)),
        ),
        compiler_params=pltpu.CompilerParams(
            dimension_semantics=("parallel", "arbitrary")),
    )(x_l, gt_l, wT, b_col)


# ----------------------------------------------------------------------------
# Kernel B: hinge-variance sums vs. cluster means (squared-distance expansion).
#   dv_ref  : (1,) in SMEM      delta_var (runtime scalar, no recompile)
#   emb_ref : (E, T)            embedding tile
#   gt_ref  : (N, T)            one-hot masks tile
#   mu_ref  : (E, N)            cluster means (per batch)
#   mu2_ref : (N, 1)            ||mu||^2 per cluster
#   vsum_ref: (N, 1)            accumulator: sum_i gt * hinge(dist)^2
# ----------------------------------------------------------------------------
def _var_kernel(dv_ref, emb_ref, gt_ref, mu_ref, mu2_ref, vsum_ref):
    @pl.when(pl.program_id(1) == 0)
    def _init():
        vsum_ref[...] = jnp.zeros_like(vsum_ref)

    emb = emb_ref[...]                                   # (E, T)
    gt = gt_ref[...]                                     # (N, T)
    mu = mu_ref[...]                                     # (E, N)
    mu2 = mu2_ref[...]                                   # (N, 1)
    dv = dv_ref[0]

    x2 = jnp.sum(emb * emb, axis=0, keepdims=True)       # (1, T)  XLU reduce
    cross = jax.lax.dot_general(                         # (N, T)  MXU
        mu, emb, (((0,), (0,)), ((), ())), preferred_element_type=jnp.float32)
    dist2 = jnp.maximum(mu2 + x2 - 2.0 * cross, 0.0)     # clamp f32 cancellation
    hinge = jnp.maximum(jnp.sqrt(dist2) - dv, 0.0)
    var = hinge * hinge * gt                             # (N, T), lane-dense
    vsum_ref[...] += jnp.sum(var, axis=-1, keepdims=True)


def disc_var_sums(delta_var_arr, emb_l, gt_l, means, mu2, hw_tile):
    B, n_emb, HW = emb_l.shape
    N = gt_l.shape[1]
    n_hw = HW // hw_tile
    return pl.pallas_call(
        _var_kernel,
        out_shape=jax.ShapeDtypeStruct((B, N, 1), jnp.float32),
        grid=(B, n_hw),
        in_specs=[
            pl.BlockSpec(memory_space=pltpu.MemorySpace.SMEM),
            pl.BlockSpec((None, n_emb, hw_tile), lambda b, k: (b, 0, k)),
            pl.BlockSpec((None, N, hw_tile), lambda b, k: (b, 0, k)),
            pl.BlockSpec((None, n_emb, N), lambda b, k: (b, 0, 0)),
            pl.BlockSpec((None, N, 1), lambda b, k: (b, 0, 0)),
        ],
        out_specs=pl.BlockSpec((None, N, 1), lambda b, k: (b, 0, 0)),
        compiler_params=pltpu.CompilerParams(
            dimension_semantics=("parallel", "arbitrary")),
    )(delta_var_arr, emb_l, gt_l, means, mu2)


# ----------------------------------------------------------------------------
# FullModel.forward
# ----------------------------------------------------------------------------
def _pick_hw_tile(hw, max_tile=2048):
    """Largest multiple of 128 that divides hw and is <= max_tile (else hw)."""
    if hw <= max_tile or hw % 128 != 0:
        return hw
    best = hw
    t = 128
    while t <= max_tile:
        if hw % t == 0:
            best = t
        t += 128
    return best


def full_model_forward(x, ins_gt, n_objects, params, delta_var, delta_dist,
                       hw_tile=None):
    B, c_in, H, W = x.shape
    HW = H * W
    n_classes = params["w_sem"].shape[1]
    n_emb = params["w_ins"].shape[1]
    N = ins_gt.shape[1]

    if hw_tile is None:
        hw_tile = _pick_hw_tile(HW)
    if HW % hw_tile != 0:
        hw_tile = HW

    # channels-in-sublanes / pixels-in-lanes: pure reshapes, no transposes.
    x_l = x.reshape(B, c_in, HW).astype(jnp.float32)
    gt_l = ins_gt.reshape(B, N, HW).astype(jnp.float32)

    # conv weights with output rows ordered [ins | ones | sem]; the "ones"
    # channel (zero weight, bias 1) folds the pixel count into the same MXU
    # contraction that produces the per-cluster embedding sums.
    wT = jnp.concatenate(
        [params["w_ins"], jnp.zeros((c_in, 1), jnp.float32), params["w_sem"]],
        axis=1).T.astype(jnp.float32)                    # (E+1+nc, Cin)
    b_col = jnp.concatenate(
        [params["b_ins"], jnp.ones((1, 1), jnp.float32), params["b_sem"]],
        axis=1).T.astype(jnp.float32)                    # (E+1+nc, 1)

    ins_l, sem_l, sums = fused_conv_stats(
        x_l, gt_l, wT, b_col, n_classes, n_emb, hw_tile)

    emb_sum = sums[:, :n_emb, :]                         # (B, E, N)
    gt_sum = sums[:, n_emb, :]                           # (B, N)
    means = emb_sum / (gt_sum[:, None, :] + EPS)         # (B, E, N)
    mu2 = jnp.sum(means * means, axis=1)[:, :, None]     # (B, N, 1)

    delta_var_arr = jnp.asarray([delta_var], dtype=jnp.float32)
    var_sum = disc_var_sums(delta_var_arr, ins_l, gt_l, means, mu2,
                            hw_tile)[:, :, 0]            # (B, N)

    n_obj = n_objects.astype(jnp.int32)
    n_obj_f = jnp.maximum(n_obj.astype(jnp.float32), 1.0)
    valid = (jnp.arange(N)[None, :] < n_obj[:, None]).astype(jnp.float32)

    # variance term: mean over valid clusters of per-cluster mean hinge^2
    per_cluster = var_sum / (gt_sum + EPS)
    var_term = jnp.mean(jnp.sum(per_cluster * valid, axis=1) / n_obj_f)

    # distance term (tiny B x N x N pairwise work -> plain JAX glue)
    mu_t = jnp.transpose(means, (0, 2, 1))               # (B, N, E)
    diff = mu_t[:, :, None, :] - mu_t[:, None, :, :]
    d = jnp.sqrt(jnp.maximum(jnp.sum(diff * diff, axis=-1), 0.0))
    eye = jnp.eye(N, dtype=jnp.float32)[None]
    pair_valid = valid[:, :, None] * valid[:, None, :] * (1.0 - eye)
    hinge_d = jnp.maximum(2.0 * delta_dist - d, 0.0) ** 2 * pair_valid
    denom = jnp.maximum(n_obj_f * (n_obj_f - 1.0), 1.0)
    dist_term = jnp.mean(jnp.where(
        n_obj_f > 1.0, jnp.sum(hinge_d, axis=(1, 2)) / denom, 0.0))

    # regularization term
    mean_norm = jnp.sqrt(jnp.maximum(jnp.sum(means * means, axis=1), 0.0))
    reg_term = jnp.mean(jnp.sum(mean_norm * valid, axis=1) / n_obj_f)

    loss = ALPHA * var_term + BETA * dist_term + GAMMA * reg_term

    sem_seg = sem_l.reshape(B, n_classes, H, W)          # NCHW, no transpose
    ins_seg = ins_l.reshape(B, n_emb, H, W)              # NCHW, no transpose
    return jnp.expand_dims(loss, 0), sem_seg, ins_seg


# ----------------------------------------------------------------------------
# Pure-JAX reference (for correctness check only)
# ----------------------------------------------------------------------------
def _ref_forward(x, ins_gt, n_objects, params, delta_var, delta_dist):
    B, c_in, H, W = x.shape
    HW = H * W
    n_classes = params["w_sem"].shape[1]
    E = params["w_ins"].shape[1]
    N = ins_gt.shape[1]
    hp = jax.lax.Precision.HIGHEST
    xf = x.reshape(B, c_in, HW)
    sem = jnp.einsum("bci,ck->bki", xf, params["w_sem"], precision=hp) \
        + params["b_sem"].T[None]
    ins = jnp.einsum("bci,ce->bei", xf, params["w_ins"], precision=hp) \
        + params["b_ins"].T[None]
    gt = ins_gt.reshape(B, N, HW)
    gt_sum = jnp.sum(gt, axis=-1)                              # (B, N)
    emb_sum = jnp.einsum("bei,bni->ben", ins, gt, precision=hp)
    means = emb_sum / (gt_sum[:, None, :] + EPS)               # (B, E, N)
    diff = ins[:, :, None, :] - means[:, :, :, None]           # (B, E, N, HW)
    dist = jnp.sqrt(jnp.sum(diff * diff, axis=1))              # (B, N, HW)
    hinge = jnp.maximum(dist - delta_var, 0.0)
    var_sum = jnp.sum(hinge * hinge * gt, axis=-1)             # (B, N)
    n_f = jnp.maximum(n_objects.astype(jnp.float32), 1.0)
    valid = (jnp.arange(N)[None, :] < n_objects[:, None]).astype(jnp.float32)
    var_term = jnp.mean(jnp.sum(var_sum / (gt_sum + EPS) * valid, axis=1) / n_f)
    mu = jnp.transpose(means, (0, 2, 1))
    dd = jnp.sqrt(jnp.maximum(
        jnp.sum((mu[:, :, None, :] - mu[:, None, :, :]) ** 2, axis=-1), 0.0))
    eye = jnp.eye(N, dtype=jnp.float32)[None]
    pv = valid[:, :, None] * valid[:, None, :] * (1.0 - eye)
    hd = jnp.maximum(2.0 * delta_dist - dd, 0.0) ** 2 * pv
    den = jnp.maximum(n_f * (n_f - 1.0), 1.0)
    dist_term = jnp.mean(jnp.where(n_f > 1.0, jnp.sum(hd, axis=(1, 2)) / den, 0.0))
    reg_term = jnp.mean(
        jnp.sum(jnp.sqrt(jnp.sum(means * means, axis=1)) * valid, axis=1) / n_f)
    loss = ALPHA * var_term + BETA * dist_term + GAMMA * reg_term
    return (jnp.expand_dims(loss, 0),
            sem.reshape(B, n_classes, H, W),
            ins.reshape(B, E, H, W))


# ----------------------------------------------------------------------------
# Deterministic parameters / inputs
# ----------------------------------------------------------------------------
def init_params(key, c_in, n_classes, n_emb):
    k1, k2, k3, k4 = jax.random.split(key, 4)
    return {
        "w_sem": 0.1 * jax.random.normal(k1, (c_in, n_classes), jnp.float32),
        "b_sem": 0.01 * jax.random.normal(k2, (1, n_classes), jnp.float32),
        "w_ins": 0.1 * jax.random.normal(k3, (c_in, n_emb), jnp.float32),
        "b_ins": 0.01 * jax.random.normal(k4, (1, n_emb), jnp.float32),
    }


if __name__ == "__main__":
    B, C_IN, H, W = 2, 4, 16, 16
    N_CLASSES, N_EMB, N_MAX = 2, 8, 4
    DELTA_VAR, DELTA_DIST = 0.5, 1.5

    key = jax.random.PRNGKey(0)
    k_x, k_p = jax.random.split(key)

    x = jax.random.normal(k_x, (B, C_IN, H, W), jnp.float32)
    params = init_params(k_p, C_IN, N_CLASSES, N_EMB)

    # deterministic instance ground truth: one-hot masks over N_MAX instances
    n_objects = jnp.array([3, 2], dtype=jnp.int32)
    row = jnp.arange(H)[:, None]
    col = jnp.arange(W)[None, :]
    labels = jnp.stack([(row + col) % 3, (2 * row + col) % 2], axis=0)  # (B,H,W)
    ins_gt = jnp.transpose(
        jax.nn.one_hot(labels, N_MAX, dtype=jnp.float32), (0, 3, 1, 2)
    )  # (B, N_MAX, H, W); channels >= n_objects[b] are all-zero

    # hw_tile=128 with HW=256 exercises the multi-tile accumulator path.
    fwd = jax.jit(partial(full_model_forward,
                          delta_var=DELTA_VAR, delta_dist=DELTA_DIST,
                          hw_tile=128))
    loss, sem_seg, ins_seg = fwd(x, ins_gt, n_objects, params)
    jax.block_until_ready((loss, sem_seg, ins_seg))

    ref_loss, ref_sem, ref_ins = _ref_forward(
        x, ins_gt, n_objects, params, DELTA_VAR, DELTA_DIST)

    assert loss.shape == (1,)
    assert sem_seg.shape == (B, N_CLASSES, H, W)
    assert ins_seg.shape == (B, N_EMB, H, W)
    assert bool(jnp.isfinite(loss[0]))
    assert bool(jnp.allclose(sem_seg, ref_sem, rtol=1e-2, atol=1e-2))
    assert bool(jnp.allclose(ins_seg, ref_ins, rtol=1e-2, atol=1e-2))
    assert bool(jnp.allclose(loss, ref_loss, rtol=1e-2, atol=1e-2))

    print("KERNEL_OK")
</pallas_src>

<mosaic_0001>
module attributes {stable_mosaic.version = 11 : i64} {
  func.func @_conv_stats_kernel(%arg0: i32, %arg1: i32, %arg2: memref<1x4x128xf32, #tpu.memory_space<vmem>>, %arg3: memref<1x4x128xf32, #tpu.memory_space<vmem>>, %arg4: memref<11x4xf32, #tpu.memory_space<vmem>>, %arg5: memref<11x1xf32, #tpu.memory_space<vmem>>, %arg6: memref<1x8x128xf32, #tpu.memory_space<vmem>>, %arg7: memref<1x2x128xf32, #tpu.memory_space<vmem>>, %arg8: memref<1x9x4xf32, #tpu.memory_space<vmem>>) attributes {dimension_semantics = [#tpu.dimension_semantics<parallel>, #tpu.dimension_semantics<arbitrary>], iteration_bounds = array<i64: 2, 2>, scalar_prefetch = 0 : i64, scratch_operands = 0 : i64, tpu.core_type = #tpu.core_type<tc>, window_params = [{transform_indices = @transform_0, window_bounds = array<i64: 1, 4, 128>}, {transform_indices = @transform_1, window_bounds = array<i64: 1, 4, 128>}, {pipeline_mode = #tpu.pipeline_mode<synchronous>, transform_indices = @transform_2, window_bounds = array<i64: 11, 4>}, {pipeline_mode = #tpu.pipeline_mode<synchronous>, transform_indices = @transform_3, window_bounds = array<i64: 11, 1>}, {transform_indices = @transform_4, window_bounds = array<i64: 1, 8, 128>}, {transform_indices = @transform_5, window_bounds = array<i64: 1, 2, 128>}, {transform_indices = @transform_6, window_bounds = array<i64: 1, 9, 4>}]} {
    %c0_i32 = arith.constant 0 : i32
    %0 = arith.cmpi eq, %arg1, %c0_i32 : i32
    %1 = arith.extui %0 : i1 to i32
    %c0_i32_0 = arith.constant 0 : i32
    %2 = arith.cmpi ne, %1, %c0_i32_0 : i32
    scf.if %2 {
      %cst_23 = arith.constant 0.000000e+00 : f32
      %28 = vector.broadcast %cst_23 : f32 to vector<9x4xf32>
      %c0_24 = arith.constant 0 : index
      %c0_25 = arith.constant 0 : index
      %c0_26 = arith.constant 0 : index
      %29 = vector.load %arg8[%c0_24, %c0_25, %c0_26] : memref<1x9x4xf32, #tpu.memory_space<vmem>>, vector<1x9x4xf32>
      %30 = vector.shape_cast %29 : vector<1x9x4xf32> to vector<9x4xf32>
      %31 = vector.shape_cast %28 : vector<9x4xf32> to vector<1x9x4xf32>
      tpu.vector_store %arg8[%c0_24, %c0_25, %c0_26], %31 {strides = array<i32>} : memref<1x9x4xf32, #tpu.memory_space<vmem>>, vector<1x9x4xf32>,
    } else {
    }
    %c0 = arith.constant 0 : index
    %c0_1 = arith.constant 0 : index
    %3 = vector.load %arg4[%c0, %c0_1] : memref<11x4xf32, #tpu.memory_space<vmem>>, vector<11x4xf32>
    %c0_2 = arith.constant 0 : index
    %c0_3 = arith.constant 0 : index
    %c0_4 = arith.constant 0 : index
    %4 = vector.load %arg2[%c0_2, %c0_3, %c0_4] : memref<1x4x128xf32, #tpu.memory_space<vmem>>, vector<1x4x128xf32>
    %5 = vector.shape_cast %4 : vector<1x4x128xf32> to vector<4x128xf32>
    %cst = arith.constant dense<0.000000e+00> : vector<11x128xf32>
    %6 = tpu.matmul %3, %5, %cst {dimension_numbers = #tpu.dot_dimension_numbers<[1], [0], [0], [1], [0, 0, 1, 1], [], []>} : vector<11x4xf32>, vector<4x128xf32>, vector<11x128xf32> -> vector<11x128xf32>
    %c0_5 = arith.constant 0 : index
    %c0_6 = arith.constant 0 : index
    %7 = vector.load %arg5[%c0_5, %c0_6] : memref<11x1xf32, #tpu.memory_space<vmem>>, vector<11x1xf32>
    %8 = vector.broadcast %7 : vector<11x1xf32> to vector<11x128xf32>
    %9 = arith.addf %6, %8 : vector<11x128xf32>
    %10 = vector.extract_strided_slice %9 {offsets = [0, 0], sizes = [8, 128], strides = [1, 1]} : vector<11x128xf32> to vector<8x128xf32>
    %c0_7 = arith.constant 0 : index
    %c0_8 = arith.constant 0 : index
    %c0_9 = arith.constant 0 : index
    %11 = vector.load %arg6[%c0_7, %c0_8, %c0_9] : memref<1x8x128xf32, #tpu.memory_space<vmem>>, vector<1x8x128xf32>
    %12 = vector.shape_cast %11 : vector<1x8x128xf32> to vector<8x128xf32>
    %13 = vector.shape_cast %10 : vector<8x128xf32> to vector<1x8x128xf32>
    tpu.vector_store %arg6[%c0_7, %c0_8, %c0_9], %13 {strides = array<i32>} : memref<1x8x128xf32, #tpu.memory_space<vmem>>, vector<1x8x128xf32>,
    %14 = vector.extract_strided_slice %9 {offsets = [9, 0], sizes = [2, 128], strides = [1, 1]} : vector<11x128xf32> to vector<2x128xf32>
    %c0_10 = arith.constant 0 : index
    %c0_11 = arith.constant 0 : index
    %c0_12 = arith.constant 0 : index
    %15 = vector.load %arg7[%c0_10, %c0_11, %c0_12] : memref<1x2x128xf32, #tpu.memory_space<vmem>>, vector<1x2x128xf32>
    %16 = vector.shape_cast %15 : vector<1x2x128xf32> to vector<2x128xf32>
    %17 = vector.shape_cast %14 : vector<2x128xf32> to vector<1x2x128xf32>
    tpu.vector_store %arg7[%c0_10, %c0_11, %c0_12], %17 {strides = array<i32>} : memref<1x2x128xf32, #tpu.memory_space<vmem>>, vector<1x2x128xf32>,
    %c0_13 = arith.constant 0 : index
    %c0_14 = arith.constant 0 : index
    %c0_15 = arith.constant 0 : index
    %18 = vector.load %arg8[%c0_13, %c0_14, %c0_15] : memref<1x9x4xf32, #tpu.memory_space<vmem>>, vector<1x9x4xf32>
    %19 = vector.shape_cast %18 : vector<1x9x4xf32> to vector<9x4xf32>
    %20 = vector.extract_strided_slice %9 {offsets = [0, 0], sizes = [9, 128], strides = [1, 1]} : vector<11x128xf32> to vector<9x128xf32>
    %c0_16 = arith.constant 0 : index
    %c0_17 = arith.constant 0 : index
    %c0_18 = arith.constant 0 : index
    %21 = vector.load %arg3[%c0_16, %c0_17, %c0_18] : memref<1x4x128xf32, #tpu.memory_space<vmem>>, vector<1x4x128xf32>
    %22 = vector.shape_cast %21 : vector<1x4x128xf32> to vector<4x128xf32>
    %cst_19 = arith.constant dense<0.000000e+00> : vector<9x4xf32>
    %23 = tpu.matmul %20, %22, %cst_19 {dimension_numbers = #tpu.dot_dimension_numbers<[1], [1], [0], [0], [0, 0, 1, 0], [], []>} : vector<9x128xf32>, vector<4x128xf32>, vector<9x4xf32> -> vector<9x4xf32>
    %24 = arith.addf %19, %23 : vector<9x4xf32>
    %c0_20 = arith.constant 0 : index
    %c0_21 = arith.constant 0 : index
    %c0_22 = arith.constant 0 : index
    %25 = vector.load %arg8[%c0_20, %c0_21, %c0_22] : memref<1x9x4xf32, #tpu.memory_space<vmem>>, vector<1x9x4xf32>
    %26 = vector.shape_cast %25 : vector<1x9x4xf32> to vector<9x4xf32>
    %27 = vector.shape_cast %24 : vector<9x4xf32> to vector<1x9x4xf32>
    tpu.vector_store %arg8[%c0_20, %c0_21, %c0_22], %27 {strides = array<i32>} : memref<1x9x4xf32, #tpu.memory_space<vmem>>, vector<1x9x4xf32>,
    return
  }
  func.func @transform_0(%arg0: i32, %arg1: i32) -> (i32, i32, i32) {
    %c0_i32 = arith.constant 0 : i32
    %c0_i32_0 = arith.constant 0 : i32
    return %arg0, %c0_i32, %arg1 : i32, i32, i32
  }
  func.func @transform_1(%arg0: i32, %arg1: i32) -> (i32, i32, i32) {
    %c0_i32 = arith.constant 0 : i32
    %c0_i32_0 = arith.constant 0 : i32
    return %arg0, %c0_i32, %arg1 : i32, i32, i32
  }
  func.func @transform_2(%arg0: i32, %arg1: i32) -> (i32, i32) {
    %c0_i32 = arith.constant 0 : i32
    %c0_i32_0 = arith.constant 0 : i32
    %c0_i32_1 = arith.constant 0 : i32
    return %c0_i32, %c0_i32_0 : i32, i32
  }
  func.func @transform_3(%arg0: i32, %arg1: i32) -> (i32, i32) {
    %c0_i32 = arith.constant 0 : i32
    %c0_i32_0 = arith.constant 0 : i32
    %c0_i32_1 = arith.constant 0 : i32
    return %c0_i32, %c0_i32_0 : i32, i32
  }
  func.func @transform_4(%arg0: i32, %arg1: i32) -> (i32, i32, i32) {
    %c0_i32 = arith.constant 0 : i32
    %c0_i32_0 = arith.constant 0 : i32
    return %arg0, %c0_i32, %arg1 : i32, i32, i32
  }
  func.func @transform_5(%arg0: i32, %arg1: i32) -> (i32, i32, i32) {
    %c0_i32 = arith.constant 0 : i32
    %c0_i32_0 = arith.constant 0 : i32
    return %arg0, %c0_i32, %arg1 : i32, i32, i32
  }
  func.func @transform_6(%arg0: i32, %arg1: i32) -> (i32, i32, i32) {
    %c0_i32 = arith.constant 0 : i32
    %c0_i32_0 = arith.constant 0 : i32
    %c0_i32_1 = arith.constant 0 : i32
    return %arg0, %c0_i32, %c0_i32_0 : i32, i32, i32
  }
}

module attributes {stable_mosaic.version = 11 : i64} {
  func.func @_var_kernel(%arg0: i32, %arg1: i32, %arg2: memref<1xf32, #tpu.memory_space<smem>>, %arg3: memref<1x8x128xf32, #tpu.memory_space<vmem>>, %arg4: memref<1x4x128xf32, #tpu.memory_space<vmem>>, %arg5: memref<1x8x4xf32, #tpu.memory_space<vmem>>, %arg6: memref<1x4x1xf32, #tpu.memory_space<vmem>>, %arg7: memref<1x4x1xf32, #tpu.memory_space<vmem>>) attributes {dimension_semantics = [#tpu.dimension_semantics<parallel>, #tpu.dimension_semantics<arbitrary>], iteration_bounds = array<i64: 2, 2>, scalar_prefetch = 0 : i64, scratch_operands = 0 : i64, tpu.core_type = #tpu.core_type<tc>, window_params = [{transform_indices = @transform_0, window_bounds = array<i64: 1>}, {transform_indices = @transform_1, window_bounds = array<i64: 1, 8, 128>}, {transform_indices = @transform_2, window_bounds = array<i64: 1, 4, 128>}, {transform_indices = @transform_3, window_bounds = array<i64: 1, 8, 4>}, {transform_indices = @transform_4, window_bounds = array<i64: 1, 4, 1>}, {transform_indices = @transform_5, window_bounds = array<i64: 1, 4, 1>}]} {
    %c0_i32 = arith.constant 0 : i32
    %0 = arith.cmpi eq, %arg1, %c0_i32 : i32
    %1 = arith.extui %0 : i1 to i32
    %c0_i32_0 = arith.constant 0 : i32
    %2 = arith.cmpi ne, %1, %c0_i32_0 : i32
    scf.if %2 {
      %cst_24 = arith.constant 0.000000e+00 : f32
      %39 = vector.broadcast %cst_24 : f32 to vector<4x1xf32>
      %c0_25 = arith.constant 0 : index
      %c0_26 = arith.constant 0 : index
      %c0_27 = arith.constant 0 : index
      %40 = vector.load %arg7[%c0_25, %c0_26, %c0_27] : memref<1x4x1xf32, #tpu.memory_space<vmem>>, vector<1x4x1xf32>
      %41 = vector.shape_cast %40 : vector<1x4x1xf32> to vector<4x1xf32>
      %42 = vector.shape_cast %39 : vector<4x1xf32> to vector<1x4x1xf32>
      tpu.vector_store %arg7[%c0_25, %c0_26, %c0_27], %42 {strides = array<i32>} : memref<1x4x1xf32, #tpu.memory_space<vmem>>, vector<1x4x1xf32>,
    } else {
    }
    %c0 = arith.constant 0 : index
    %c0_1 = arith.constant 0 : index
    %c0_2 = arith.constant 0 : index
    %3 = vector.load %arg3[%c0, %c0_1, %c0_2] : memref<1x8x128xf32, #tpu.memory_space<vmem>>, vector<1x8x128xf32>
    %4 = vector.shape_cast %3 : vector<1x8x128xf32> to vector<8x128xf32>
    %c0_3 = arith.constant 0 : index
    %c0_4 = arith.constant 0 : index
    %c0_5 = arith.constant 0 : index
    %5 = vector.load %arg4[%c0_3, %c0_4, %c0_5] : memref<1x4x128xf32, #tpu.memory_space<vmem>>, vector<1x4x128xf32>
    %6 = vector.shape_cast %5 : vector<1x4x128xf32> to vector<4x128xf32>
    %c0_6 = arith.constant 0 : index
    %c0_7 = arith.constant 0 : index
    %c0_8 = arith.constant 0 : index
    %7 = vector.load %arg5[%c0_6, %c0_7, %c0_8] : memref<1x8x4xf32, #tpu.memory_space<vmem>>, vector<1x8x4xf32>
    %8 = vector.shape_cast %7 : vector<1x8x4xf32> to vector<8x4xf32>
    %c0_9 = arith.constant 0 : index
    %c0_10 = arith.constant 0 : index
    %c0_11 = arith.constant 0 : index
    %9 = vector.load %arg6[%c0_9, %c0_10, %c0_11] : memref<1x4x1xf32, #tpu.memory_space<vmem>>, vector<1x4x1xf32>
    %10 = vector.shape_cast %9 : vector<1x4x1xf32> to vector<4x1xf32>
    %c0_12 = arith.constant 0 : index
    %11 = memref.load %arg2[%c0_12] : memref<1xf32, #tpu.memory_space<smem>>
    %12 = arith.mulf %4, %4 : vector<8x128xf32>
    %cst = arith.constant dense<0.000000e+00> : vector<128xf32>
    %13 = vector.multi_reduction <add>, %12, %cst [0] : vector<8x128xf32> to vector<128xf32>
    %14 = vector.shape_cast %13 : vector<128xf32> to vector<1x128xf32>
    %cst_13 = arith.constant dense<0.000000e+00> : vector<4x128xf32>
    %15 = tpu.matmul %8, %4, %cst_13 {dimension_numbers = #tpu.dot_dimension_numbers<[0], [0], [1], [1], [0, 1, 1, 1], [], []>} : vector<8x4xf32>, vector<8x128xf32>, vector<4x128xf32> -> vector<4x128xf32>
    %16 = vector.broadcast %10 : vector<4x1xf32> to vector<4x128xf32>
    %17 = vector.broadcast %14 : vector<1x128xf32> to vector<4x128xf32>
    %18 = arith.addf %16, %17 : vector<4x128xf32>
    %cst_14 = arith.constant 2.000000e+00 : f32
    %19 = vector.broadcast %cst_14 : f32 to vector<4x128xf32>
    %20 = arith.mulf %19, %15 : vector<4x128xf32>
    %21 = arith.subf %18, %20 : vector<4x128xf32>
    %cst_15 = arith.constant 0.000000e+00 : f32
    %22 = vector.broadcast %cst_15 : f32 to vector<4x128xf32>
    %23 = arith.maximumf %21, %22 : vector<4x128xf32>
    %24 = math.sqrt %23 : vector<4x128xf32>
    %25 = vector.broadcast %11 : f32 to vector<4x128xf32>
    %26 = arith.subf %24, %25 : vector<4x128xf32>
    %cst_16 = arith.constant 0.000000e+00 : f32
    %27 = vector.broadcast %cst_16 : f32 to vector<4x128xf32>
    %28 = arith.maximumf %26, %27 : vector<4x128xf32>
    %29 = arith.mulf %28, %28 : vector<4x128xf32>
    %30 = arith.mulf %29, %6 : vector<4x128xf32>
    %c0_17 = arith.constant 0 : index
    %c0_18 = arith.constant 0 : index
    %c0_19 = arith.constant 0 : index
    %31 = vector.load %arg7[%c0_17, %c0_18, %c0_19] : memref<1x4x1xf32, #tpu.memory_space<vmem>>, vector<1x4x1xf32>
    %32 = vector.shape_cast %31 : vector<1x4x1xf32> to vector<4x1xf32>
    %cst_20 = arith.constant dense<0.000000e+00> : vector<4xf32>
    %33 = vector.multi_reduction <add>, %30, %cst_20 [1] : vector<4x128xf32> to vector<4xf32>
    %34 = vector.shape_cast %33 : vector<4xf32> to vector<4x1xf32>
    %35 = arith.addf %32, %34 : vector<4x1xf32>
    %c0_21 = arith.constant 0 : index
    %c0_22 = arith.constant 0 : index
    %c0_23 = arith.constant 0 : index
    %36 = vector.load %arg7[%c0_21, %c0_22, %c0_23] : memref<1x4x1xf32, #tpu.memory_space<vmem>>, vector<1x4x1xf32>
    %37 = vector.shape_cast %36 : vector<1x4x1xf32> to vector<4x1xf32>
    %38 = vector.shape_cast %35 : vector<4x1xf32> to vector<1x4x1xf32>
    tpu.vector_store %arg7[%c0_21, %c0_22, %c0_23], %38 {strides = array<i32>} : memref<1x4x1xf32, #tpu.memory_space<vmem>>, vector<1x4x1xf32>,
    return
  }
  func.func @transform_0(%arg0: i32, %arg1: i32) -> i32 {
    %c0_i32 = arith.constant 0 : i32
    %c0_i32_0 = arith.constant 0 : i32
    return %c0_i32 : i32
  }
  func.func @transform_1(%arg0: i32, %arg1: i32) -> (i32, i32, i32) {
    %c0_i32 = arith.constant 0 : i32
    %c0_i32_0 = arith.constant 0 : i32
    return %arg0, %c0_i32, %arg1 : i32, i32, i32
  }
  func.func @transform_2(%arg0: i32, %arg1: i32) -> (i32, i32, i32) {
    %c0_i32 = arith.constant 0 : i32
    %c0_i32_0 = arith.constant 0 : i32
    return %arg0, %c0_i32, %arg1 : i32, i32, i32
  }
  func.func @transform_3(%arg0: i32, %arg1: i32) -> (i32, i32, i32) {
    %c0_i32 = arith.constant 0 : i32
    %c0_i32_0 = arith.constant 0 : i32
    %c0_i32_1 = arith.constant 0 : i32
    return %arg0, %c0_i32, %c0_i32_0 : i32, i32, i32
  }
  func.func @transform_4(%arg0: i32, %arg1: i32) -> (i32, i32, i32) {
    %c0_i32 = arith.constant 0 : i32
    %c0_i32_0 = arith.constant 0 : i32
    %c0_i32_1 = arith.constant 0 : i32
    return %arg0, %c0_i32, %c0_i32_0 : i32, i32, i32
  }
  func.func @transform_5(%arg0: i32, %arg1: i32) -> (i32, i32, i32) {
    %c0_i32 = arith.constant 0 : i32
    %c0_i32_0 = arith.constant 0 : i32
    %c0_i32_1 = arith.constant 0 : i32
    return %arg0, %c0_i32, %c0_i32_0 : i32, i32, i32
  }
}

</mosaic_0001>

<llo_original>
// kernel: full_model_forward.3
$region0: #{full_model_forward.3}
  #allocation0 [shape = 'u32[]', space=smem, size = 0x4, offset = 0x4, fixed_abs, tag = 'smem constant byte address 0x4 - core index']
  #allocation1 [shape = 'u32[144,128]{1,0:T(1,128)}', space=vmem, size = 0x12000, scoped, tag = 'internal scratch']
  #allocation2 [shape = 'f32[1]{0:T(128)S(6)}', space=smem, size = 0x200, scoped, tag = 'scoped memory for full_model_forward.3']
  %s0 = inlined_call_operand.<no memory space> [shape: f32[1], index: 0, kind: input, shape index: {}]
  %s1 = inlined_call_operand.vmem [shape: f32[2,8,256], index: 1, kind: input, shape index: {}]
  %s2 = inlined_call_operand.vmem [shape: f32[2,4,256], index: 2, kind: input, shape index: {}]
  %s3 = inlined_call_operand.vmem [shape: f32[2,8,4], index: 3, kind: input, shape index: {}]
  %s4 = inlined_call_operand.vmem [shape: f32[2,4,1], index: 4, kind: input, shape index: {}]
  %s5 = inlined_call_operand.vmem [shape: f32[2,4,1], index: 5, kind: output, shape index: {}]
  %s6 = sld [smem:[#allocation0]]
  $region57: #{full_model_forward.3} parent=0
    _
  %s8 = ssub.s32 1, %s6
  %s9 = scalar_select 0, %s8, %s6
  %10 = sst [smem:[#allocation2]] %s0
  loop: start=0, step=1, limit=6
  $region2: #{full_model_forward.3} parent=0 // loop_pre_header
    _
  $region3: #{full_model_forward.3} parent=0 // loop_header
    %s12 = sphi 0, %s16
    %p13 = scmp.ge.s32.totalorder %s12, 6
    %s19 = sphi 0, %s31
    %s20 = sphi 0, %s27
    %s21 = sphi 0, %s19
    %s22 = sphi 0, %s20
    %s23 = sphi 0, %s21
    %s24 = sphi 0, %s22
    %s32 = sphi 0, %s32
    %s34 = sphi 0, %s32
    %s35 = sphi 0, %s34
    %s49 = sphi 0, %s35
    %s57 = sphi 0, %s59
    %s60 = sphi 0, %s57
    %s61 = sphi 0, %s60
    %s77 = sphi 0, %s61
    %s85 = sphi 0, %s87
    %s88 = sphi 0, %s85
    %s89 = sphi 0, %s88
    %s105 = sphi 0, %s89
    %s111 = sphi 0, %s113
    %s114 = sphi 0, %s111
    %s115 = sphi 0, %s114
    %s131 = sphi 0, %s115
    %s137 = sphi 0, %s139
    %s140 = sphi 0, %s137
    %s141 = sphi 0, %s140
    %s157 = sphi 0, %s141
    %s163 = sphi 0, %s165
    %s166 = sphi 0, %s163
    %s167 = sphi 0, %s166
    %s183 = sphi 0, %s167
  $region4: #{full_model_forward.3} parent=0 // loop_header_branch
    %15 = sbr.rel (%p13) target = $region8
  $region5: #{full_model_forward.3} parent=0 // loop_body
    %s17 = ssub.s32 %s12, 1
    %s18 = ssub.s32 %s12, 2
    %s25 = sadd.s32 1, %s20
    %p26 = scmp.ge.s32.totalorder %s25, 2
    %s27 = scalar_select %p26, 0, %s25
    %s28 = sadd.s32 1, %s19
    %s29 = scalar_select %p26, %s28, %s19
    %p30 = scmp.ge.s32.totalorder %s29, 2
    %s31 = scalar_select %p30, 0, %s29
    %s33 = sadd.s32 %s32, 1
    %p36 = scmp.eq.s32.totalorder %s12, 3
    %p37 = scmp.ne.s32.totalorder %s32, %s34
    %p38 = scmp.eq.s32.totalorder %s12, 0
    %p39 = por %p37, %p38
    %p40 = scmp.ne.s32.totalorder %s32, %s34
    %p41 = scmp.eq.s32.totalorder %s17, 3
    %p42 = por %p40, %p41
    %p43 = scmp.ne.s32.totalorder %s34, %s35
    %p44 = scmp.eq.s32.totalorder %s17, 0
    %p45 = por %p43, %p44
    %p46 = scmp.ne.s32.totalorder %s34, %s35
    %p47 = scmp.eq.s32.totalorder %s18, 3
    %p48 = por %p46, %p47
    %p50 = scmp.ne.s32.totalorder %s35, %s49
    %p51 = scmp.eq.s32.totalorder %s18, 0
    %p52 = por %p50, %p51
    %s53 = ssub.s32 %s19, %s31
    %s54 = ssub.s32 %s20, %s27
    %s55 = sor.u32 %s53, %s54
    %p56 = scmp.eq.s32.totalorder %s55, 0
    %s58 = sadd.s32 %s57, 1
    %s59 = scalar_select %p56, %s57, %s58
    %p62 = pneg %p56
    %p63 = scmp.eq.s32.totalorder %s12, 3
    %p64 = por %p62, %p63
    %p65 = scmp.ne.s32.totalorder %s57, %s60
    %p66 = scmp.eq.s32.totalorder %s12, 0
    %p67 = por %p65, %p66
    %p68 = scmp.ne.s32.totalorder %s57, %s60
    %p69 = scmp.eq.s32.totalorder %s17, 3
    %p70 = por %p68, %p69
    %p71 = scmp.ne.s32.totalorder %s60, %s61
    %p72 = scmp.eq.s32.totalorder %s17, 0
    %p73 = por %p71, %p72
    %p74 = scmp.ne.s32.totalorder %s60, %s61
    %p75 = scmp.eq.s32.totalorder %s18, 3
    %p76 = por %p74, %p75
    %p78 = scmp.ne.s32.totalorder %s61, %s77
    %p79 = scmp.eq.s32.totalorder %s18, 0
    %p80 = por %p78, %p79
    %s81 = ssub.s32 %s19, %s31
    %s82 = ssub.s32 %s20, %s27
    %s83 = sor.u32 %s81, %s82
    %p84 = scmp.eq.s32.totalorder %s83, 0
    %s86 = sadd.s32 %s85, 1
    %s87 = scalar_select %p84, %s85, %s86
    %p90 = pneg %p84
    %p91 = scmp.eq.s32.totalorder %s12, 3
    %p92 = por %p90, %p91
    %p93 = scmp.ne.s32.totalorder %s85, %s88
    %p94 = scmp.eq.s32.totalorder %s12, 0
    %p95 = por %p93, %p94
    %p96 = scmp.ne.s32.totalorder %s85, %s88
    %p97 = scmp.eq.s32.totalorder %s17, 3
    %p98 = por %p96, %p97
    %p99 = scmp.ne.s32.totalorder %s88, %s89
    %p100 = scmp.eq.s32.totalorder %s17, 0
    %p101 = por %p99, %p100
    %p102 = scmp.ne.s32.totalorder %s88, %s89
    %p103 = scmp.eq.s32.totalorder %s18, 3
    %p104 = por %p102, %p103
    %p106 = scmp.ne.s32.totalorder %s89, %s105
    %p107 = scmp.eq.s32.totalorder %s18, 0
    %p108 = por %p106, %p107
    %s109 = ssub.s32 %s19, %s31
    %p110 = scmp.eq.s32.totalorder %s109, 0
    %s112 = sadd.s32 %s111, 1
    %s113 = scalar_select %p110, %s111, %s112
    %p116 = pneg %p110
    %p117 = scmp.eq.s32.totalorder %s12, 3
    %p118 = por %p116, %p117
    %p119 = scmp.ne.s32.totalorder %s111, %s114
    %p120 = scmp.eq.s32.totalorder %s12, 0
    %p121 = por %p119, %p120
    %p122 = scmp.ne.s32.totalorder %s111, %s114
    %p123 = scmp.eq.s32.totalorder %s17, 3
    %p124 = por %p122, %p123
    %p125 = scmp.ne.s32.totalorder %s114, %s115
    %p126 = scmp.eq.s32.totalorder %s17, 0
    %p127 = por %p125, %p126
    %p128 = scmp.ne.s32.totalorder %s114, %s115
    %p129 = scmp.eq.s32.totalorder %s18, 3
    %p130 = por %p128, %p129
    %p132 = scmp.ne.s32.totalorder %s115, %s131
    %p133 = scmp.eq.s32.totalorder %s18, 0
    %p134 = por %p132, %p133
    %s135 = ssub.s32 %s19, %s31
    %p136 = scmp.eq.s32.totalorder %s135, 0
    %s138 = sadd.s32 %s137, 1
    %s139 = scalar_select %p136, %s137, %s138
    %p142 = pneg %p136
    %p143 = scmp.eq.s32.totalorder %s12, 3
    %p144 = por %p142, %p143
    %p145 = scmp.ne.s32.totalorder %s137, %s140
    %p146 = scmp.eq.s32.totalorder %s12, 0
    %p147 = por %p145, %p146
    %p148 = scmp.ne.s32.totalorder %s137, %s140
    %p149 = scmp.eq.s32.totalorder %s17, 3
    %p150 = por %p148, %p149
    %p151 = scmp.ne.s32.totalorder %s140, %s141
    %p152 = scmp.eq.s32.totalorder %s17, 0
    %p153 = por %p151, %p152
    %p154 = scmp.ne.s32.totalorder %s140, %s141
    %p155 = scmp.eq.s32.totalorder %s18, 3
    %p156 = por %p154, %p155
    %p158 = scmp.ne.s32.totalorder %s141, %s157
    %p159 = scmp.eq.s32.totalorder %s18, 0
    %p160 = por %p158, %p159
    %s161 = ssub.s32 %s19, %s31
    %p162 = scmp.eq.s32.totalorder %s161, 0
    %s164 = sadd.s32 %s163, 1
    %s165 = scalar_select %p162, %s163, %s164
    %p168 = pneg %p162
    %p169 = scmp.eq.s32.totalorder %s12, 3
    %p170 = por %p168, %p169
    %p171 = scmp.ne.s32.totalorder %s163, %s166
    %p172 = scmp.eq.s32.totalorder %s12, 0
    %p173 = por %p171, %p172
    %p174 = scmp.ne.s32.totalorder %s163, %s166
    %p175 = scmp.eq.s32.totalorder %s17, 3
    %p176 = por %p174, %p175
    %p177 = scmp.ne.s32.totalorder %s166, %s167
    %p178 = scmp.eq.s32.totalorder %s17, 0
    %p179 = por %p177, %p178
    %p180 = scmp.ne.s32.totalorder %s166, %s167
    %p181 = scmp.eq.s32.totalorder %s18, 3
    %p182 = por %p180, %p181
    %p184 = scmp.ne.s32.totalorder %s167, %s183
    %p185 = scmp.eq.s32.totalorder %s18, 0
    %p186 = por %p184, %p185
    %p187 = scmp.le.s32.totalorder 1, %s12
    %p188 = scmp.lt.s32.totalorder %s12, 5
    %p189 = pnand %p187, %p188
    %p190 = pneg %p189
    // Predicated region
    $region9: #{full_model_forward.3} parent=5 // pred_check
      _
    $region10: #{full_model_forward.3} parent=5 // pred_check_branch
      %192 = sbr.rel (%p189) target = $region12
    $region11: #{full_model_forward.3} parent=5 // pred_region
      %s193 = ssub.s32 %s12, 1
      // Predicated region
      $region13: #{full_model_forward.3} parent=11 // pred_check
        %p194 = pneg %p45
      $region14: #{full_model_forward.3} parent=11 // pred_check_branch
        %196 = sbr.rel (%p194) target = $region16
      $region15: #{full_model_forward.3} parent=11 // pred_region
        _
      $region16: #{full_model_forward.3} parent=11 // pred_fallthru
        _
    $region12: #{full_model_forward.3} parent=5 // pred_fallthru
      _
    %p197 = scmp.lt.s32.totalorder %s12, 4
    // Predicated region
    $region17: #{full_model_forward.3} parent=5 // pred_check
      %p198 = pneg %p197
    $region18: #{full_model_forward.3} parent=5 // pred_check_branch
      %200 = sbr.rel (%p198) target = $region20
    $region19: #{full_model_forward.3} parent=5 // pred_region
      // Predicated region
      $region21: #{full_model_forward.3} parent=19 // pred_check
        %p201 = pneg %p67
      $region22: #{full_model_forward.3} parent=19 // pred_check_branch
        %203 = sbr.rel (%p201) target = $region24
      $region23: #{full_model_forward.3} parent=19 // pred_region
        %p204 = scmp.lt.s32.totalorder %s19, 1
        %s205 = scalar_select %p204, %s19, 1
        %p206 = scmp.lt.s32.totalorder %s20, 1
        %s207 = scalar_select %p206, %s20, 1
        %s208 = smul.addr %s205, 2
        %s209 = sadd.s32 %s207, %s208
        %s210 = smul.addr %s209, 8
        %s211 = scalar_lea.vmem %s1, %s210
      $region24: #{full_model_forward.3} parent=19 // pred_fallthru
        _
      // Predicated region
      $region25: #{full_model_forward.3} parent=19 // pred_check
        %p212 = pneg %p95
      $region26: #{full_model_forward.3} parent=19 // pred_check_branch
        %214 = sbr.rel (%p212) target = $region28
      $region27: #{full_model_forward.3} parent=19 // pred_region
        %p215 = scmp.lt.s32.totalorder %s19, 1
        %s216 = scalar_select %p215, %s19, 1
        %p217 = scmp.lt.s32.totalorder %s20, 1
        %s218 = scalar_select %p217, %s20, 1
        %s219 = smul.addr %s216, 2
        %s220 = sadd.s32 %s218, %s219
        %s221 = smul.addr %s220, 4
        %s222 = scalar_lea.vmem %s2, %s221
      $region28: #{full_model_forward.3} parent=19 // pred_fallthru
        _
      // Predicated region
      $region29: #{full_model_forward.3} parent=19 // pred_check
        %p223 = pneg %p121
      $region30: #{full_model_forward.3} parent=19 // pred_check_branch
        %225 = sbr.rel (%p223) target = $region32
      $region31: #{full_model_forward.3} parent=19 // pred_region
        %p226 = scmp.lt.s32.totalorder %s19, 1
        %s227 = scalar_select %p226, %s19, 1
        %s228 = smul.addr %s227, 8
        %s229 = scalar_lea.vmem %s3, %s228
      $region32: #{full_model_forward.3} parent=19 // pred_fallthru
        _
      // Predicated region
      $region33: #{full_model_forward.3} parent=19 // pred_check
        %p230 = pneg %p147
      $region34: #{full_model_forward.3} parent=19 // pred_check_branch
        %232 = sbr.rel (%p230) target = $region36
      $region35: #{full_model_forward.3} parent=19 // pred_region
        %p233 = scmp.lt.s32.totalorder %s19, 1
        %s234 = scalar_select %p233, %s19, 1
        %s235 = smul.addr %s234, 4
        %s236 = scalar_lea.vmem %s4, %s235
      $region36: #{full_model_forward.3} parent=19 // pred_fallthru
        _
    $region20: #{full_model_forward.3} parent=5 // pred_fallthru
      _
    %p237 = scmp.le.s32.totalorder 1, %s12
    %p238 = scmp.lt.s32.totalorder %s12, 5
    %p239 = pnand %p237, %p238
    %p240 = pneg %p239
    // Predicated region
    $region37: #{full_model_forward.3} parent=5 // pred_check
      _
    $region38: #{full_model_forward.3} parent=5 // pred_check_branch
      %242 = sbr.rel (%p239) target = $region40
    $region39: #{full_model_forward.3} parent=5 // pred_region
      %s243 = ssub.s32 %s12, 1
      %p244 = pneg %p45
      %p245 = pneg %p42
      %p246 = scmp.lt.s32.totalorder %s21, 1
      %s247 = scalar_select %p246, %s21, 1
      %p248 = scmp.lt.s32.totalorder %s22, 1
      %s249 = scalar_select %p248, %s22, 1
      %s250 = smul.addr %s247, 2
      %s251 = sadd.s32 %s249, %s250
      %s252 = smul.addr %s251, 8
      %s253 = scalar_lea.vmem %s1, %s252
      %p254 = pneg %p73
      %p255 = pneg %p70
      %p256 = scmp.lt.s32.totalorder %s21, 1
      %s257 = scalar_select %p256, %s21, 1
      %p258 = scmp.lt.s32.totalorder %s22, 1
      %s259 = scalar_select %p258, %s22, 1
      %s260 = smul.addr %s257, 2
      %s261 = sadd.s32 %s259, %s260
      %s262 = smul.addr %s261, 4
      %s263 = scalar_lea.vmem %s2, %s262
      %p264 = pneg %p101
      %p265 = pneg %p98
      %p266 = scmp.lt.s32.totalorder %s21, 1
      %s267 = scalar_select %p266, %s21, 1
      %s268 = smul.addr %s267, 8
      %s269 = scalar_lea.vmem %s3, %s268
      %p270 = pneg %p127
      %p271 = pneg %p124
      %p272 = scmp.lt.s32.totalorder %s21, 1
      %s273 = scalar_select %p272, %s21, 1
      %s274 = smul.addr %s273, 4
      %s275 = scalar_lea.vmem %s4, %s274
      %p276 = pneg %p153
      %p277 = pneg %p150
      %p278 = pneg %p179
      %p279 = pneg %p176
      %p280 = scmp.lt.s32.totalorder %s21, 1
      %s281 = scalar_select %p280, %s21, 1
      %s282 = smul.addr %s281, 4
      %s283 = scalar_lea.vmem %s5, %s282
      %p284 = scmp.lt.s32.totalorder %s21, 1
      %s285 = scalar_select %p284, %s21, 1
      %p286 = scmp.lt.s32.totalorder %s22, 1
      %s287 = scalar_select %p286, %s22, 1
      %s288 = smul.addr %s285, 2
      %s289 = sadd.s32 %s287, %s288
      %s290 = smul.addr %s289, 8
      %s291 = scalar_lea.vmem %s1, %s290
      %p292 = scmp.lt.s32.totalorder %s21, 1
      %s293 = scalar_select %p292, %s21, 1
      %p294 = scmp.lt.s32.totalorder %s22, 1
      %s295 = scalar_select %p294, %s22, 1
      %s296 = smul.addr %s293, 2
      %s297 = sadd.s32 %s295, %s296
      %s298 = smul.addr %s297, 4
      %s299 = scalar_lea.vmem %s2, %s298
      %p300 = scmp.lt.s32.totalorder %s21, 1
      %s301 = scalar_select %p300, %s21, 1
      %s302 = smul.addr %s301, 8
      %s303 = scalar_lea.vmem %s3, %s302
      %p304 = scmp.lt.s32.totalorder %s21, 1
      %s305 = scalar_select %p304, %s21, 1
      %s306 = smul.addr %s305, 4
      %s307 = scalar_lea.vmem %s4, %s306
      %p308 = scmp.lt.s32.totalorder %s21, 1
      %s309 = scalar_select %p308, %s21, 1
      %s310 = smul.addr %s309, 4
      %s311 = scalar_lea.vmem %s5, %s310
      %p312 = scmp.eq.s32.totalorder %s22, 0
      // Predicated region
      $region41: #{full_model_forward.3} parent=39 // pred_check
        %p313 = pneg %p312
      $region42: #{full_model_forward.3} parent=39 // pred_check_branch
        %315 = sbr.rel (%p313) target = $region44
      $region43: #{full_model_forward.3} parent=39 // pred_region
        %vm316 = vcmask 3072
        %317 = vst.msk [vmem:[%s311] sm:$0xf] %vm316, 0.0
      $region44: #{full_model_forward.3} parent=39 // pred_fallthru
        _
      %v318 = vld [vmem:[%s291] sm:$0xff]
      %v319 = vld [vmem:[%s299] sm:$0xf]
      %v320 = vld [vmem:[%s303] sm:$0xff]
      %v321 = vld [vmem:[%s307] sm:$0xf]
      %s322 = sld [smem:[#allocation2]]
      %v323 = vmul.f32 %v318, %v318
      %v324 = vrot.slane %v323, 4
      %v325 = vadd.f32 %v323, %v324
      %v326 = vrot.slane %v325, 2
      %v327 = vadd.f32 %v325, %v326
      %v328 = vrot.slane %v327, 1
      %v329 = vadd.f32 %v327, %v328
      %330 = vxpose.xlu0.b32.start [1/16] %v320, 128
      %331 = vxpose.xlu0.b32.cont [2/16] 0.0, 128
      %332 = vxpose.xlu0.b32.cont [3/16] 0.0, 128
      %333 = vxpose.xlu0.b32.cont [4/16] 0.0, 128
      %334 = vxpose.xlu0.b32.cont [5/16] 0.0, 128
      %335 = vxpose.xlu0.b32.cont [6/16] 0.0, 128
      %336 = vxpose.xlu0.b32.cont [7/16] 0.0, 128
      %337 = vxpose.xlu0.b32.cont [8/16] 0.0, 128
      %338 = vxpose.xlu0.b32.cont [9/16] 0.0, 128
      %339 = vxpose.xlu0.b32.cont [10/16] 0.0, 128
      %340 = vxpose.xlu0.b32.cont [11/16] 0.0, 128
      %341 = vxpose.xlu0.b32.cont [12/16] 0.0, 128
      %342 = vxpose.xlu0.b32.cont [13/16] 0.0, 128
      %343 = vxpose.xlu0.b32.cont [14/16] 0.0, 128
      %344 = vxpose.xlu0.b32.cont [15/16] 0.0, 128
      %345 = vxpose.xlu0.b32.end [16/16] 0.0, 128
      %v346 = vpop.trf.xlu0
      %v347 = vpop.trf.xlu0
      %v348 = vpop.trf.xlu0
      %v349 = vpop.trf.xlu0
      %v350 = vpop.trf.xlu0
      %v351 = vpop.trf.xlu0
      %v352 = vpop.trf.xlu0
      %v353 = vpop.trf.xlu0
      %v354 = vpop.trf.xlu0
      %v355 = vpop.trf.xlu0
      %v356 = vpop.trf.xlu0
      %v357 = vpop.trf.xlu0
      %v358 = vpop.trf.xlu0
      %v359 = vpop.trf.xlu0
      %v360 = vpop.trf.xlu0
      %v361 = vpop.trf.xlu0
      %vm362 = vcmask 64512
      %v364 = vsel %vm362, %v346, 0
      %366 = vmatprep.subr.mxu0 0.0
      %367 = vmatpush1.msra.mxu0 %v318
      %368 = vmatprep.subr.mxu0 0.0
      %369 = vmatpush1.msra.mxu0 0.0
      %370 = vmatprep.subr.mxu0 0.0
      %371 = vmatpush1.msra.mxu0 0.0
      %372 = vmatprep.subr.mxu0 0.0
      %373 = vmatpush1.msra.mxu0 0.0
      %374 = vmatprep.subr.mxu0 0.0
      %375 = vmatpush1.msra.mxu0 0.0
      %376 = vmatprep.subr.mxu0 0.0
      %377 = vmatpush1.msra.mxu0 0.0
      %378 = vmatprep.subr.mxu0 0.0
      %379 = vmatpush1.msra.mxu0 0.0
      %380 = vmatprep.subr.mxu0 0.0
      %381 = vmatpush1.msra.mxu0 0.0
      %382 = vmatprep.subr.mxu0 0.0
      %383 = vmatpush1.msra.mxu0 0.0
      %384 = vmatprep.subr.mxu0 0.0
      %385 = vmatpush1.msra.mxu0 0.0
      %386 = vmatprep.subr.mxu0 0.0
      %387 = vmatpush1.msra.mxu0 0.0
      %388 = vmatprep.subr.mxu0 0.0
      %389 = vmatpush1.msra.mxu0 0.0
      %390 = vmatprep.subr.mxu0 0.0
      %391 = vmatpush1.msra.mxu0 0.0
      %392 = vmatprep.subr.mxu0 0.0
      %393 = vmatpush1.msra.mxu0 0.0
      %394 = vmatprep.subr.mxu0 0.0
      %395 = vmatpush1.msra.mxu0 0.0
      %396 = vmatprep.subr.mxu0 0.0
      %397 = vmatpush1.msra.mxu0 0.0
      %398 = vmatprep.subr.mxu0 0.0
      %399 = vmatpush1.msra.mxu0 0.0
      %400 = vmatprep.subr.mxu0 0.0
      %401 = vmatpush1.msra.mxu0 0.0
      %402 = vmatprep.subr.mxu0 0.0
      %403 = vmatpush1.msra.mxu0 0.0
      %404 = vmatprep.subr.mxu0 0.0
      %405 = vmatpush1.msra.mxu0 0.0
      %406 = vmatprep.subr.mxu0 0.0
      %407 = vmatpush1.msra.mxu0 0.0
      %408 = vmatprep.subr.mxu0 0.0
      %409 = vmatpush1.msra.mxu0 0.0
      %410 = vmatprep.subr.mxu0 0.0
      %411 = vmatpush1.msra.mxu0 0.0
      %412 = vmatprep.subr.mxu0 0.0
      %413 = vmatpush1.msra.mxu0 0.0
      %414 = vmatprep.subr.mxu0 0.0
      %415 = vmatpush1.msra.mxu0 0.0
      %416 = vmatprep.subr.mxu0 0.0
      %417 = vmatpush1.msra.mxu0 0.0
      %418 = vmatprep.subr.mxu0 0.0
      %419 = vmatpush1.msra.mxu0 0.0
      %420 = vmatprep.subr.mxu0 0.0
      %421 = vmatpush1.msra.mxu0 0.0
      %422 = vmatprep.subr.mxu0 0.0
      %423 = vmatpush1.msra.mxu0 0.0
      %424 = vmatprep.subr.mxu0 0.0
      %425 = vmatpush1.msra.mxu0 0.0
      %426 = vmatprep.subr.mxu0 0.0
      %427 = vmatpush1.msra.mxu0 0.0
      %428 = vmatprep.subr.mxu0 0.0
      %429 = vmatpush1.msra.mxu0 0.0
      %430 = vmatprep.mubr.f32.mxu0 0.0
      %431 = vmatmul.mubr.f32.gmra.mrb[0].mxu0 %v364
      %v432 = vpop.f32.mrb[0].mxu0
      %v433 = vadd.f32 0.0, %v432
      %v434 = vpop.f32.mrb[0].mxu0
      %435 = vdwg.mxu0
      %437 = vset.pattern.permute.xlu0 0
      %438 = vperm.xlu0 %437, %v321
      %v439 = vpop.permute.xlu0 %438
      %v441 = vadd.f32 %v439, %v329
      %v442 = vmul.f32 %v433, 2.0
      %v443 = vsub.f32 %v441, %v442
      %v444 = vmax.f32 %v443, 0.0
      %v445 = vrsqrt.pop %v444
      %v446 = vmul.f32 %v444, %v445
      %vm447 = vcmp.eq.f32.partialorder %v444, inf
      %v448 = vsel %vm447, %v444, %v446
      %vm449 = vcmp.eq.f32.partialorder %v444, 0.0
      %v450 = vand.u32 %v444, 2147483648
      %v451 = vsel %vm449, %v450, %v448
      %v452 = vstv %s322
      %v453 = vsub.f32 %v451, %v452
      %v454 = vmax.f32 %v453, 0.0
      %v455 = vmul.f32 %v454, %v454
      %v456 = vmul.f32 %v455, %v319
      %v457 = vld [vmem:[%s311] sm:$0xf]
      %vm458 = vcmask 1043456
      %v459 = vsel %vm458, %v456, 0.0
      %460 = vadd.xlane.f32.xlu0 %v459
      %v461 = vpop.xlane.xlu0 %460
      %v462 = vadd.f32 %v457, %v461
      %vm463 = vcmask 3072
      %464 = vst.msk [vmem:[%s311] sm:$0xf] %vm463, %v462
      %p465 = scmp.lt.s32.totalorder %s21, 1
      %s466 = scalar_select %p465, %s21, 1
      %s467 = smul.addr %s466, 4
      %s468 = scalar_lea.vmem %s5, %s467
      // Predicated region
      $region45: #{full_model_forward.3} parent=39 // pred_check
        %p469 = pneg %p176
      $region46: #{full_model_forward.3} parent=39 // pred_check_branch
        %471 = sbr.rel (%p469) target = $region48
      $region47: #{full_model_forward.3} parent=39 // pred_region
        _
      $region48: #{full_model_forward.3} parent=39 // pred_fallthru
        _
    $region40: #{full_model_forward.3} parent=5 // pred_fallthru
      _
    %p472 = scmp.le.s32.totalorder 2, %s12
    // Predicated region
    $region49: #{full_model_forward.3} parent=5 // pred_check
      %p473 = pneg %p472
    $region50: #{full_model_forward.3} parent=5 // pred_check_branch
      %475 = sbr.rel (%p473) target = $region52
    $region51: #{full_model_forward.3} parent=5 // pred_region
      %s476 = ssub.s32 %s12, 2
      // Predicated region
      $region53: #{full_model_forward.3} parent=51 // pred_check
        %p477 = pneg %p182
      $region54: #{full_model_forward.3} parent=51 // pred_check_branch
        %479 = sbr.rel (%p477) target = $region56
      $region55: #{full_model_forward.3} parent=51 // pred_region
        %p480 = scmp.lt.s32.totalorder %s23, 1
        %s481 = scalar_select %p480, %s23, 1
        %s482 = smul.addr %s481, 4
        %s483 = scalar_lea.vmem %s5, %s482
      $region56: #{full_model_forward.3} parent=51 // pred_fallthru
        _
    $region52: #{full_model_forward.3} parent=5 // pred_fallthru
      _
  $region6: #{full_model_forward.3} parent=0 // loop_footer
    %s16 = sadd.s32 1, %s12
  $region7: #{full_model_forward.3} parent=0 // loop_footer_branch
    %11 = sbr.rel target = $region3
  $region8: #{full_model_forward.3} parent=0 // loop_exit
    _

// kernel: full_model_forward.2
$region0: #{full_model_forward.2}
  #allocation0 [shape = 'u32[]', space=smem, size = 0x4, offset = 0x4, fixed_abs, tag = 'smem constant byte address 0x4 - core index']
  #allocation1 [shape = 'u32[144,128]{1,0:T(1,128)}', space=vmem, size = 0x12000, scoped, tag = 'internal scratch']
  %s0 = inlined_call_operand.vmem [shape: f32[2,4,256], index: 0, kind: input, shape index: {}]
  %s1 = inlined_call_operand.vmem [shape: f32[2,4,256], index: 1, kind: input, shape index: {}]
  %s2 = inlined_call_operand.vmem [shape: f32[11,4], index: 2, kind: input, shape index: {}]
  %s3 = inlined_call_operand.vmem [shape: f32[11,1], index: 3, kind: input, shape index: {}]
  %s4 = inlined_call_operand.vmem [shape: f32[2,8,256], index: 4, kind: output, shape index: {0}]
  %s5 = inlined_call_operand.vmem [shape: f32[2,2,256], index: 5, kind: output, shape index: {1}]
  %s6 = inlined_call_operand.vmem [shape: f32[2,9,4], index: 6, kind: output, shape index: {2}]
  %7 = xla_tuple %s4, %s5, %s6
  %s8 = sld [smem:[#allocation0]]
  $region69: #{full_model_forward.2} parent=0
    _
  %s10 = ssub.s32 1, %s8
  %s11 = scalar_select 0, %s10, %s8
  loop: start=0, step=1, limit=6
  $region2: #{full_model_forward.2} parent=0 // loop_pre_header
    _
  $region3: #{full_model_forward.2} parent=0 // loop_header
    %s13 = sphi 0, %s17
    %p14 = scmp.ge.s32.totalorder %s13, 6
    %s20 = sphi 0, %s32
    %s21 = sphi 0, %s28
    %s22 = sphi 0, %s20
    %s23 = sphi 0, %s21
    %s24 = sphi 0, %s22
    %s25 = sphi 0, %s23
    %s37 = sphi 0, %s39
    %s40 = sphi 0, %s37
    %s41 = sphi 0, %s40
    %s57 = sphi 0, %s41
    %s65 = sphi 0, %s67
    %s68 = sphi 0, %s65
    %s69 = sphi 0, %s68
    %s85 = sphi 0, %s69
    %s89 = sphi 0, %s89
    %s91 = sphi 0, %s89
    %s92 = sphi 0, %s91
    %s106 = sphi 0, %s92
    %s110 = sphi 0, %s110
    %s112 = sphi 0, %s110
    %s113 = sphi 0, %s112
    %s127 = sphi 0, %s113
    %s135 = sphi 0, %s137
    %s138 = sphi 0, %s135
    %s139 = sphi 0, %s138
    %s155 = sphi 0, %s139
    %s163 = sphi 0, %s165
    %s166 = sphi 0, %s163
    %s167 = sphi 0, %s166
    %s183 = sphi 0, %s167
    %s189 = sphi 0, %s191
    %s192 = sphi 0, %s189
    %s193 = sphi 0, %s192
    %s209 = sphi 0, %s193
  $region4: #{full_model_forward.2} parent=0 // loop_header_branch
    %16 = sbr.rel (%p14) target = $region8
  $region5: #{full_model_forward.2} parent=0 // loop_body
    %s18 = ssub.s32 %s13, 1
    %s19 = ssub.s32 %s13, 2
    %s26 = sadd.s32 1, %s21
    %p27 = scmp.ge.s32.totalorder %s26, 2
    %s28 = scalar_select %p27, 0, %s26
    %s29 = sadd.s32 1, %s20
    %s30 = scalar_select %p27, %s29, %s20
    %p31 = scmp.ge.s32.totalorder %s30, 2
    %s32 = scalar_select %p31, 0, %s30
    %s33 = ssub.s32 %s20, %s32
    %s34 = ssub.s32 %s21, %s28
    %s35 = sor.u32 %s33, %s34
    %p36 = scmp.eq.s32.totalorder %s35, 0
    %s38 = sadd.s32 %s37, 1
    %s39 = scalar_select %p36, %s37, %s38
    %p42 = pneg %p36
    %p43 = scmp.eq.s32.totalorder %s13, 3
    %p44 = por %p42, %p43
    %p45 = scmp.ne.s32.totalorder %s37, %s40
    %p46 = scmp.eq.s32.totalorder %s13, 0
    %p47 = por %p45, %p46
    %p48 = scmp.ne.s32.totalorder %s37, %s40
    %p49 = scmp.eq.s32.totalorder %s18, 3
    %p50 = por %p48, %p49
    %p51 = scmp.ne.s32.totalorder %s40, %s41
    %p52 = scmp.eq.s32.totalorder %s18, 0
    %p53 = por %p51, %p52
    %p54 = scmp.ne.s32.totalorder %s40, %s41
    %p55 = scmp.eq.s32.totalorder %s19, 3
    %p56 = por %p54, %p55
    %p58 = scmp.ne.s32.totalorder %s41, %s57
    %p59 = scmp.eq.s32.totalorder %s19, 0
    %p60 = por %p58, %p59
    %s61 = ssub.s32 %s20, %s32
    %s62 = ssub.s32 %s21, %s28
    %s63 = sor.u32 %s61, %s62
    %p64 = scmp.eq.s32.totalorder %s63, 0
    %s66 = sadd.s32 %s65, 1
    %s67 = scalar_select %p64, %s65, %s66
    %p70 = pneg %p64
    %p71 = scmp.eq.s32.totalorder %s13, 3
    %p72 = por %p70, %p71
    %p73 = scmp.ne.s32.totalorder %s65, %s68
    %p74 = scmp.eq.s32.totalorder %s13, 0
    %p75 = por %p73, %p74
    %p76 = scmp.ne.s32.totalorder %s65, %s68
    %p77 = scmp.eq.s32.totalorder %s18, 3
    %p78 = por %p76, %p77
    %p79 = scmp.ne.s32.totalorder %s68, %s69
    %p80 = scmp.eq.s32.totalorder %s18, 0
    %p81 = por %p79, %p80
    %p82 = scmp.ne.s32.totalorder %s68, %s69
    %p83 = scmp.eq.s32.totalorder %s19, 3
    %p84 = por %p82, %p83
    %p86 = scmp.ne.s32.totalorder %s69, %s85
    %p87 = scmp.eq.s32.totalorder %s19, 0
    %p88 = por %p86, %p87
    %s90 = sadd.s32 %s89, 1
    %p93 = scmp.eq.s32.totalorder %s13, 3
    %p94 = scmp.ne.s32.totalorder %s89, %s91
    %p95 = scmp.eq.s32.totalorder %s13, 0
    %p96 = por %p94, %p95
    %p97 = scmp.ne.s32.totalorder %s89, %s91
    %p98 = scmp.eq.s32.totalorder %s18, 3
    %p99 = por %p97, %p98
    %p100 = scmp.ne.s32.totalorder %s91, %s92
    %p101 = scmp.eq.s32.totalorder %s18, 0
    %p102 = por %p100, %p101
    %p103 = scmp.ne.s32.totalorder %s91, %s92
    %p104 = scmp.eq.s32.totalorder %s19, 3
    %p105 = por %p103, %p104
    %p107 = scmp.ne.s32.totalorder %s92, %s106
    %p108 = scmp.eq.s32.totalorder %s19, 0
    %p109 = por %p107, %p108
    %s111 = sadd.s32 %s110, 1
    %p114 = scmp.eq.s32.totalorder %s13, 3
    %p115 = scmp.ne.s32.totalorder %s110, %s112
    %p116 = scmp.eq.s32.totalorder %s13, 0
    %p117 = por %p115, %p116
    %p118 = scmp.ne.s32.totalorder %s110, %s112
    %p119 = scmp.eq.s32.totalorder %s18, 3
    %p120 = por %p118, %p119
    %p121 = scmp.ne.s32.totalorder %s112, %s113
    %p122 = scmp.eq.s32.totalorder %s18, 0
    %p123 = por %p121, %p122
    %p124 = scmp.ne.s32.totalorder %s112, %s113
    %p125 = scmp.eq.s32.totalorder %s19, 3
    %p126 = por %p124, %p125
    %p128 = scmp.ne.s32.totalorder %s113, %s127
    %p129 = scmp.eq.s32.totalorder %s19, 0
    %p130 = por %p128, %p129
    %s131 = ssub.s32 %s20, %s32
    %s132 = ssub.s32 %s21, %s28
    %s133 = sor.u32 %s131, %s132
    %p134 = scmp.eq.s32.totalorder %s133, 0
    %s136 = sadd.s32 %s135, 1
    %s137 = scalar_select %p134, %s135, %s136
    %p140 = pneg %p134
    %p141 = scmp.eq.s32.totalorder %s13, 3
    %p142 = por %p140, %p141
    %p143 = scmp.ne.s32.totalorder %s135, %s138
    %p144 = scmp.eq.s32.totalorder %s13, 0
    %p145 = por %p143, %p144
    %p146 = scmp.ne.s32.totalorder %s135, %s138
    %p147 = scmp.eq.s32.totalorder %s18, 3
    %p148 = por %p146, %p147
    %p149 = scmp.ne.s32.totalorder %s138, %s139
    %p150 = scmp.eq.s32.totalorder %s18, 0
    %p151 = por %p149, %p150
    %p152 = scmp.ne.s32.totalorder %s138, %s139
    %p153 = scmp.eq.s32.totalorder %s19, 3
    %p154 = por %p152, %p153
    %p156 = scmp.ne.s32.totalorder %s139, %s155
    %p157 = scmp.eq.s32.totalorder %s19, 0
    %p158 = por %p156, %p157
    %s159 = ssub.s32 %s20, %s32
    %s160 = ssub.s32 %s21, %s28
    %s161 = sor.u32 %s159, %s160
    %p162 = scmp.eq.s32.totalorder %s161, 0
    %s164 = sadd.s32 %s163, 1
    %s165 = scalar_select %p162, %s163, %s164
    %p168 = pneg %p162
    %p169 = scmp.eq.s32.totalorder %s13, 3
    %p170 = por %p168, %p169
    %p171 = scmp.ne.s32.totalorder %s163, %s166
    %p172 = scmp.eq.s32.totalorder %s13, 0
    %p173 = por %p171, %p172
    %p174 = scmp.ne.s32.totalorder %s163, %s166
    %p175 = scmp.eq.s32.totalorder %s18, 3
    %p176 = por %p174, %p175
    %p177 = scmp.ne.s32.totalorder %s166, %s167
    %p178 = scmp.eq.s32.totalorder %s18, 0
    %p179 = por %p177, %p178
    %p180 = scmp.ne.s32.totalorder %s166, %s167
    %p181 = scmp.eq.s32.totalorder %s19, 3
    %p182 = por %p180, %p181
    %p184 = scmp.ne.s32.totalorder %s167, %s183
    %p185 = scmp.eq.s32.totalorder %s19, 0
    %p186 = por %p184, %p185
    %s187 = ssub.s32 %s20, %s32
    %p188 = scmp.eq.s32.totalorder %s187, 0
    %s190 = sadd.s32 %s189, 1
    %s191 = scalar_select %p188, %s189, %s190
    %p194 = pneg %p188
    %p195 = scmp.eq.s32.totalorder %s13, 3
    %p196 = por %p194, %p195
    %p197 = scmp.ne.s32.totalorder %s189, %s192
    %p198 = scmp.eq.s32.totalorder %s13, 0
    %p199 = por %p197, %p198
    %p200 = scmp.ne.s32.totalorder %s189, %s192
    %p201 = scmp.eq.s32.totalorder %s18, 3
    %p202 = por %p200, %p201
    %p203 = scmp.ne.s32.totalorder %s192, %s193
    %p204 = scmp.eq.s32.totalorder %s18, 0
    %p205 = por %p203, %p204
    %p206 = scmp.ne.s32.totalorder %s192, %s193
    %p207 = scmp.eq.s32.totalorder %s19, 3
    %p208 = por %p206, %p207
    %p210 = scmp.ne.s32.totalorder %s193, %s209
    %p211 = scmp.eq.s32.totalorder %s19, 0
    %p212 = por %p210, %p211
    %p213 = scmp.le.s32.totalorder 1, %s13
    %p214 = scmp.lt.s32.totalorder %s13, 5
    %p215 = pnand %p213, %p214
    %p216 = pneg %p215
    // Predicated region
    $region9: #{full_model_forward.2} parent=5 // pred_check
      _
    $region10: #{full_model_forward.2} parent=5 // pred_check_branch
      %218 = sbr.rel (%p215) target = $region12
    $region11: #{full_model_forward.2} parent=5 // pred_region
      %s219 = ssub.s32 %s13, 1
      // Predicated region
      $region13: #{full_model_forward.2} parent=11 // pred_check
        %p220 = pneg %p102
      $region14: #{full_model_forward.2} parent=11 // pred_check_branch
        %222 = sbr.rel (%p220) target = $region16
      $region15: #{full_model_forward.2} parent=11 // pred_region
        _
      $region16: #{full_model_forward.2} parent=11 // pred_fallthru
        _
      // Predicated region
      $region17: #{full_model_forward.2} parent=11 // pred_check
        %p223 = pneg %p123
      $region18: #{full_model_forward.2} parent=11 // pred_check_branch
        %225 = sbr.rel (%p223) target = $region20
      $region19: #{full_model_forward.2} parent=11 // pred_region
        _
      $region20: #{full_model_forward.2} parent=11 // pred_fallthru
        _
    $region12: #{full_model_forward.2} parent=5 // pred_fallthru
      _
    %p226 = scmp.lt.s32.totalorder %s13, 4
    // Predicated region
    $region21: #{full_model_forward.2} parent=5 // pred_check
      %p227 = pneg %p226
    $region22: #{full_model_forward.2} parent=5 // pred_check_branch
      %229 = sbr.rel (%p227) target = $region24
    $region23: #{full_model_forward.2} parent=5 // pred_region
      // Predicated region
      $region25: #{full_model_forward.2} parent=23 // pred_check
        %p230 = pneg %p47
      $region26: #{full_model_forward.2} parent=23 // pred_check_branch
        %232 = sbr.rel (%p230) target = $region28
      $region27: #{full_model_forward.2} parent=23 // pred_region
        %p233 = scmp.lt.s32.totalorder %s20, 1
        %s234 = scalar_select %p233, %s20, 1
        %p235 = scmp.lt.s32.totalorder %s21, 1
        %s236 = scalar_select %p235, %s21, 1
        %s237 = smul.addr %s234, 2
        %s238 = sadd.s32 %s236, %s237
        %s239 = smul.addr %s238, 4
        %s240 = scalar_lea.vmem %s0, %s239
      $region28: #{full_model_forward.2} parent=23 // pred_fallthru
        _
      // Predicated region
      $region29: #{full_model_forward.2} parent=23 // pred_check
        %p241 = pneg %p75
      $region30: #{full_model_forward.2} parent=23 // pred_check_branch
        %243 = sbr.rel (%p241) target = $region32
      $region31: #{full_model_forward.2} parent=23 // pred_region
        %p244 = scmp.lt.s32.totalorder %s20, 1
        %s245 = scalar_select %p244, %s20, 1
        %p246 = scmp.lt.s32.totalorder %s21, 1
        %s247 = scalar_select %p246, %s21, 1
        %s248 = smul.addr %s245, 2
        %s249 = sadd.s32 %s247, %s248
        %s250 = smul.addr %s249, 4
        %s251 = scalar_lea.vmem %s1, %s250
      $region32: #{full_model_forward.2} parent=23 // pred_fallthru
        _
    $region24: #{full_model_forward.2} parent=5 // pred_fallthru
      _
    %p252 = scmp.le.s32.totalorder 1, %s13
    %p253 = scmp.lt.s32.totalorder %s13, 5
    %p254 = pnand %p252, %p253
    %p255 = pneg %p254
    // Predicated region
    $region33: #{full_model_forward.2} parent=5 // pred_check
      _
    $region34: #{full_model_forward.2} parent=5 // pred_check_branch
      %257 = sbr.rel (%p254) target = $region36
    $region35: #{full_model_forward.2} parent=5 // pred_region
      %s258 = ssub.s32 %s13, 1
      %p259 = scmp.lt.s32.totalorder %s22, 1
      %s260 = scalar_select %p259, %s22, 1
      %p261 = scmp.lt.s32.totalorder %s23, 1
      %s262 = scalar_select %p261, %s23, 1
      %s263 = smul.addr %s260, 2
      %s264 = sadd.s32 %s262, %s263
      %s265 = smul.addr %s264, 4
      %s266 = scalar_lea.vmem %s0, %s265
      %p267 = pneg %p53
      %p268 = pneg %p50
      %p269 = scmp.lt.s32.totalorder %s22, 1
      %s270 = scalar_select %p269, %s22, 1
      %p271 = scmp.lt.s32.totalorder %s23, 1
      %s272 = scalar_select %p271, %s23, 1
      %s273 = smul.addr %s270, 2
      %s274 = sadd.s32 %s272, %s273
      %s275 = smul.addr %s274, 4
      %s276 = scalar_lea.vmem %s1, %s275
      %p277 = pneg %p81
      %p278 = pneg %p78
      %p279 = pneg %p102
      %p280 = pneg %p99
      %p281 = pneg %p123
      %p282 = pneg %p120
      %p283 = pneg %p151
      %p284 = pneg %p148
      %p285 = scmp.lt.s32.totalorder %s22, 1
      %s286 = scalar_select %p285, %s22, 1
      %p287 = scmp.lt.s32.totalorder %s23, 1
      %s288 = scalar_select %p287, %s23, 1
      %s289 = smul.addr %s286, 2
      %s290 = sadd.s32 %s288, %s289
      %s291 = smul.addr %s290, 8
      %s292 = scalar_lea.vmem %s4, %s291
      %p293 = pneg %p179
      %p294 = pneg %p176
      %p295 = scmp.lt.s32.totalorder %s22, 1
      %s296 = scalar_select %p295, %s22, 1
      %p297 = scmp.lt.s32.totalorder %s23, 1
      %s298 = scalar_select %p297, %s23, 1
      %s299 = smul.addr %s296, 2
      %s300 = sadd.s32 %s298, %s299
      %s301 = smul.addr %s300, 2
      %s302 = scalar_lea.vmem %s5, %s301
      %p303 = pneg %p205
      %p304 = pneg %p202
      %p305 = scmp.lt.s32.totalorder %s22, 1
      %s306 = scalar_select %p305, %s22, 1
      %s307 = smul.addr %s306, 2
      %s308 = smul.addr %s307, 8
      %s309 = scalar_lea.vmem %s6, %s308
      %p310 = scmp.lt.s32.totalorder %s22, 1
      %s311 = scalar_select %p310, %s22, 1
      %p312 = scmp.lt.s32.totalorder %s23, 1
      %s313 = scalar_select %p312, %s23, 1
      %s314 = smul.addr %s311, 2
      %s315 = sadd.s32 %s313, %s314
      %s316 = smul.addr %s315, 4
      %s317 = scalar_lea.vmem %s0, %s316
      %p318 = scmp.lt.s32.totalorder %s22, 1
      %s319 = scalar_select %p318, %s22, 1
      %p320 = scmp.lt.s32.totalorder %s23, 1
      %s321 = scalar_select %p320, %s23, 1
      %s322 = smul.addr %s319, 2
      %s323 = sadd.s32 %s321, %s322
      %s324 = smul.addr %s323, 4
      %s325 = scalar_lea.vmem %s1, %s324
      %p326 = scmp.lt.s32.totalorder %s22, 1
      %s327 = scalar_select %p326, %s22, 1
      %p328 = scmp.lt.s32.totalorder %s23, 1
      %s329 = scalar_select %p328, %s23, 1
      %s330 = smul.addr %s327, 2
      %s331 = sadd.s32 %s329, %s330
      %s332 = smul.addr %s331, 8
      %s333 = scalar_lea.vmem %s4, %s332
      %p334 = scmp.lt.s32.totalorder %s22, 1
      %s335 = scalar_select %p334, %s22, 1
      %p336 = scmp.lt.s32.totalorder %s23, 1
      %s337 = scalar_select %p336, %s23, 1
      %s338 = smul.addr %s335, 2
      %s339 = sadd.s32 %s337, %s338
      %s340 = smul.addr %s339, 2
      %s341 = scalar_lea.vmem %s5, %s340
      %p342 = scmp.lt.s32.totalorder %s22, 1
      %s343 = scalar_select %p342, %s22, 1
      %s344 = smul.addr %s343, 2
      %s345 = smul.addr %s344, 8
      %s346 = scalar_lea.vmem %s6, %s345
      %p347 = scmp.eq.s32.totalorder %s23, 0
      // Predicated region
      $region37: #{full_model_forward.2} parent=35 // pred_check
        %p348 = pneg %p347
      $region38: #{full_model_forward.2} parent=35 // pred_check_branch
        %350 = sbr.rel (%p348) target = $region40
      $region39: #{full_model_forward.2} parent=35 // pred_region
        %vm351 = vcmask 31744
        %352 = vst.msk [vmem:[%s346] sm:$0xff] %vm351, 0.0
        %vm353 = vcmask 24576
        %354 = vst.msk [vmem:[%s346 + $0x8] sm:$0x1] %vm353, 0.0
      $region40: #{full_model_forward.2} parent=35 // pred_fallthru
        _
      %v355 = vld [vmem:[%s2] sm:$0xff]
      %v356 = vld [vmem:[%s2 + $0x8] sm:$0x7]
      %v357 = vld [vmem:[%s317] sm:$0xf]
      %v358 = vld [vmem:[%s3] sm:$0xff]
      %v359 = vld [vmem:[%s3 + $0x8] sm:$0x7]
      %361 = vset.pattern.permute.xlu0 0
      %362 = vperm.xlu0 %361, %v358
      %v363 = vpop.permute.xlu0 %362
      %366 = vset.pattern.permute.xlu0 0
      %367 = vperm.xlu0 %366, %v359
      %v368 = vpop.permute.xlu0 %367
      %vm370 = vcmask 31744
      %v372 = vsel %vm370, %v355, 0
      %v375 = vsel %vm370, %v356, 0
      %vm377 = vcmask 1043456
      %v379 = vsel %vm377, %v357, 0
      %381 = vmatprep.subr.mxu0 0.0
      %382 = vmatpush1.msra.mxu0 %v379
      %383 = vmatprep.subr.mxu0 0.0
      %384 = vmatpush1.msra.mxu0 0.0
      %385 = vmatprep.subr.mxu0 0.0
      %386 = vmatpush1.msra.mxu0 0.0
      %387 = vmatprep.subr.mxu0 0.0
      %388 = vmatpush1.msra.mxu0 0.0
      %389 = vmatprep.subr.mxu0 0.0
      %390 = vmatpush1.msra.mxu0 0.0
      %391 = vmatprep.subr.mxu0 0.0
      %392 = vmatpush1.msra.mxu0 0.0
      %393 = vmatprep.subr.mxu0 0.0
      %394 = vmatpush1.msra.mxu0 0.0
      %395 = vmatprep.subr.mxu0 0.0
      %396 = vmatpush1.msra.mxu0 0.0
      %397 = vmatprep.subr.mxu0 0.0
      %398 = vmatpush1.msra.mxu0 0.0
      %399 = vmatprep.subr.mxu0 0.0
      %400 = vmatpush1.msra.mxu0 0.0
      %401 = vmatprep.subr.mxu0 0.0
      %402 = vmatpush1.msra.mxu0 0.0
      %403 = vmatprep.subr.mxu0 0.0
      %404 = vmatpush1.msra.mxu0 0.0
      %405 = vmatprep.subr.mxu0 0.0
      %406 = vmatpush1.msra.mxu0 0.0
      %407 = vmatprep.subr.mxu0 0.0
      %408 = vmatpush1.msra.mxu0 0.0
      %409 = vmatprep.subr.mxu0 0.0
      %410 = vmatpush1.msra.mxu0 0.0
      %411 = vmatprep.subr.mxu0 0.0
      %412 = vmatpush1.msra.mxu0 0.0
      %413 = vmatprep.subr.mxu0 0.0
      %414 = vmatpush1.msra.mxu0 0.0
      %415 = vmatprep.subr.mxu0 0.0
      %416 = vmatpush1.msra.mxu0 0.0
      %417 = vmatprep.subr.mxu0 0.0
      %418 = vmatpush1.msra.mxu0 0.0
      %419 = vmatprep.subr.mxu0 0.0
      %420 = vmatpush1.msra.mxu0 0.0
      %421 = vmatprep.subr.mxu0 0.0
      %422 = vmatpush1.msra.mxu0 0.0
      %423 = vmatprep.subr.mxu0 0.0
      %424 = vmatpush1.msra.mxu0 0.0
      %425 = vmatprep.subr.mxu0 0.0
      %426 = vmatpush1.msra.mxu0 0.0
      %427 = vmatprep.subr.mxu0 0.0
      %428 = vmatpush1.msra.mxu0 0.0
      %429 = vmatprep.subr.mxu0 0.0
      %430 = vmatpush1.msra.mxu0 0.0
      %431 = vmatprep.subr.mxu0 0.0
      %432 = vmatpush1.msra.mxu0 0.0
      %433 = vmatprep.subr.mxu0 0.0
      %434 = vmatpush1.msra.mxu0 0.0
      %435 = vmatprep.subr.mxu0 0.0
      %436 = vmatpush1.msra.mxu0 0.0
      %437 = vmatprep.subr.mxu0 0.0
      %438 = vmatpush1.msra.mxu0 0.0
      %439 = vmatprep.subr.mxu0 0.0
      %440 = vmatpush1.msra.mxu0 0.0
      %441 = vmatprep.subr.mxu0 0.0
      %442 = vmatpush1.msra.mxu0 0.0
      %443 = vmatprep.subr.mxu0 0.0
      %444 = vmatpush1.msra.mxu0 0.0
      %445 = vmatprep.mubr.f32.mxu0 0.0
      %446 = vmatmul.mubr.f32.gmra.mrb[0].mxu0 %v372
      %v447 = vpop.f32.mrb[0].mxu0
      %v448 = vadd.f32 %v363, %v447
      %v449 = vpop.f32.mrb[0].mxu0
      %450 = vmatprep.mubr.f32.mxu0 0.0
      %451 = vmatmul.mubr.f32.gmra.mrb[0].mxu0 %v375
      %v452 = vpop.f32.mrb[0].mxu0
      %v453 = vadd.f32 %v368, %v452
      %v454 = vpop.f32.mrb[0].mxu0
      %455 = vdwg.mxu0
      %456 = vst [vmem:[%s333] sm:$0xff] %v448
      %457 = vst [vmem:[%s341 - $0x1] sm:$0x6] %v453
      %v458 = vld [vmem:[%s346] sm:$0xff]
      %v459 = vld [vmem:[%s346 + $0x8] sm:$0x1]
      %v460 = vld [vmem:[%s325] sm:$0xf]
      %461 = vmatprep.subr.mxu0 0.0
      %462 = vmatpush1.xpose.msra.mxu0 %v460
      %463 = vmatprep.subr.mxu0 0.0
      %464 = vmatpush1.xpose.msra.mxu0 0.0
      %465 = vmatprep.subr.mxu0 0.0
      %466 = vmatpush1.xpose.msra.mxu0 0.0
      %467 = vmatprep.subr.mxu0 0.0
      %468 = vmatpush1.xpose.msra.mxu0 0.0
      %469 = vmatprep.subr.mxu0 0.0
      %470 = vmatpush1.xpose.msra.mxu0 0.0
      %471 = vmatprep.subr.mxu0 0.0
      %472 = vmatpush1.xpose.msra.mxu0 0.0
      %473 = vmatprep.subr.mxu0 0.0
      %474 = vmatpush1.xpose.msra.mxu0 0.0
      %475 = vmatprep.subr.mxu0 0.0
      %476 = vmatpush1.xpose.msra.mxu0 0.0
      %477 = vmatprep.subr.mxu0 0.0
      %478 = vmatpush1.xpose.msra.mxu0 0.0
      %479 = vmatprep.subr.mxu0 0.0
      %480 = vmatpush1.xpose.msra.mxu0 0.0
      %481 = vmatprep.subr.mxu0 0.0
      %482 = vmatpush1.xpose.msra.mxu0 0.0
      %483 = vmatprep.subr.mxu0 0.0
      %484 = vmatpush1.xpose.msra.mxu0 0.0
      %485 = vmatprep.subr.mxu0 0.0
      %486 = vmatpush1.xpose.msra.mxu0 0.0
      %487 = vmatprep.subr.mxu0 0.0
      %488 = vmatpush1.xpose.msra.mxu0 0.0
      %489 = vmatprep.subr.mxu0 0.0
      %490 = vmatpush1.xpose.msra.mxu0 0.0
      %491 = vmatprep.subr.mxu0 0.0
      %492 = vmatpush1.xpose.msra.mxu0 0.0
      %493 = vmatprep.subr.mxu0 0.0
      %494 = vmatpush1.xpose.msra.mxu0 0.0
      %495 = vmatprep.subr.mxu0 0.0
      %496 = vmatpush1.xpose.msra.mxu0 0.0
      %497 = vmatprep.subr.mxu0 0.0
      %498 = vmatpush1.xpose.msra.mxu0 0.0
      %499 = vmatprep.subr.mxu0 0.0
      %500 = vmatpush1.xpose.msra.mxu0 0.0
      %501 = vmatprep.subr.mxu0 0.0
      %502 = vmatpush1.xpose.msra.mxu0 0.0
      %503 = vmatprep.subr.mxu0 0.0
      %504 = vmatpush1.xpose.msra.mxu0 0.0
      %505 = vmatprep.subr.mxu0 0.0
      %506 = vmatpush1.xpose.msra.mxu0 0.0
      %507 = vmatprep.subr.mxu0 0.0
      %508 = vmatpush1.xpose.msra.mxu0 0.0
      %509 = vmatprep.subr.mxu0 0.0
      %510 = vmatpush1.xpose.msra.mxu0 0.0
      %511 = vmatprep.subr.mxu0 0.0
      %512 = vmatpush1.xpose.msra.mxu0 0.0
      %513 = vmatprep.subr.mxu0 0.0
      %514 = vmatpush1.xpose.msra.mxu0 0.0
      %515 = vmatprep.subr.mxu0 0.0
      %516 = vmatpush1.xpose.msra.mxu0 0.0
      %517 = vmatprep.subr.mxu0 0.0
      %518 = vmatpush1.xpose.msra.mxu0 0.0
      %519 = vmatprep.subr.mxu0 0.0
      %520 = vmatpush1.xpose.msra.mxu0 0.0
      %521 = vmatprep.subr.mxu0 0.0
      %522 = vmatpush1.xpose.msra.mxu0 0.0
      %523 = vmatprep.subr.mxu0 0.0
      %524 = vmatpush1.xpose.msra.mxu0 0.0
      %525 = vmatprep.mubr.f32.mxu0 0.0
      %526 = vmatmul.mubr.f32.gmra.mrb[0].mxu0 %v448
      %v527 = vpop.f32.mrb[0].mxu0
      %v528 = vadd.f32 0.0, %v527
      %v529 = vpop.f32.mrb[0].mxu0
      %530 = vmatprep.mubr.f32.mxu0 0.0
      %531 = vmatmul.mubr.f32.gmra.mrb[0].mxu0 %v453
      %v532 = vpop.f32.mrb[0].mxu0
      %v533 = vadd.f32 0.0, %v532
      %v534 = vpop.f32.mrb[0].mxu0
      %535 = vdwg.mxu0
      %v536 = vadd.f32 %v458, %v528
      %v537 = vadd.f32 %v459, %v533
      %538 = vst.msk [vmem:[%s346] sm:$0xff] %vm370, %v536
      %vm539 = vcmask 24576
      %540 = vst.msk [vmem:[%s346 + $0x8] sm:$0x1] %vm539, %v537
      %p541 = scmp.lt.s32.totalorder %s22, 1
      %s542 = scalar_select %p541, %s22, 1
      %p543 = scmp.lt.s32.totalorder %s23, 1
      %s544 = scalar_select %p543, %s23, 1
      %s545 = smul.addr %s542, 2
      %s546 = sadd.s32 %s544, %s545
      %s547 = smul.addr %s546, 8
      %s548 = scalar_lea.vmem %s4, %s547
      %p549 = scmp.lt.s32.totalorder %s22, 1
      %s550 = scalar_select %p549, %s22, 1
      %p551 = scmp.lt.s32.totalorder %s23, 1
      %s552 = scalar_select %p551, %s23, 1
      %s553 = smul.addr %s550, 2
      %s554 = sadd.s32 %s552, %s553
      %s555 = smul.addr %s554, 2
      %s556 = scalar_lea.vmem %s5, %s555
      %p557 = scmp.lt.s32.totalorder %s22, 1
      %s558 = scalar_select %p557, %s22, 1
      %s559 = smul.addr %s558, 2
      %s560 = smul.addr %s559, 8
      %s561 = scalar_lea.vmem %s6, %s560
      // Predicated region
      $region41: #{full_model_forward.2} parent=35 // pred_check
        %p562 = pneg %p148
      $region42: #{full_model_forward.2} parent=35 // pred_check_branch
        %564 = sbr.rel (%p562) target = $region44
      $region43: #{full_model_forward.2} parent=35 // pred_region
        _
      $region44: #{full_model_forward.2} parent=35 // pred_fallthru
        _
      // Predicated region
      $region45: #{full_model_forward.2} parent=35 // pred_check
        %p565 = pneg %p176
      $region46: #{full_model_forward.2} parent=35 // pred_check_branch
        %567 = sbr.rel (%p565) target = $region48
      $region47: #{full_model_forward.2} parent=35 // pred_region
        _
      $region48: #{full_model_forward.2} parent=35 // pred_fallthru
        _
      // Predicated region
      $region49: #{full_model_forward.2} parent=35 // pred_check
        %p568 = pneg %p202
      $region50: #{full_model_forward.2} parent=35 // pred_check_branch
        %570 = sbr.rel (%p568) target = $region52
      $region51: #{full_model_forward.2} parent=35 // pred_region
        _
      $region52: #{full_model_forward.2} parent=35 // pred_fallthru
        _
    $region36: #{full_model_forward.2} parent=5 // pred_fallthru
      _
    %p571 = scmp.le.s32.totalorder 2, %s13
    // Predicated region
    $region53: #{full_model_forward.2} parent=5 // pred_check
      %p572 = pneg %p571
    $region54: #{full_model_forward.2} parent=5 // pred_check_branch
      %574 = sbr.rel (%p572) target = $region56
    $region55: #{full_model_forward.2} parent=5 // pred_region
      %s575 = ssub.s32 %s13, 2
      // Predicated region
      $region57: #{full_model_forward.2} parent=55 // pred_check
        %p576 = pneg %p154
      $region58: #{full_model_forward.2} parent=55 // pred_check_branch
        %578 = sbr.rel (%p576) target = $region60
      $region59: #{full_model_forward.2} parent=55 // pred_region
        %p579 = scmp.lt.s32.totalorder %s24, 1
        %s580 = scalar_select %p579, %s24, 1
        %p581 = scmp.lt.s32.totalorder %s25, 1
        %s582 = scalar_select %p581, %s25, 1
        %s583 = smul.addr %s580, 2
        %s584 = sadd.s32 %s582, %s583
        %s585 = smul.addr %s584, 8
        %s586 = scalar_lea.vmem %s4, %s585
      $region60: #{full_model_forward.2} parent=55 // pred_fallthru
        _
      // Predicated region
      $region61: #{full_model_forward.2} parent=55 // pred_check
        %p587 = pneg %p182
      $region62: #{full_model_forward.2} parent=55 // pred_check_branch
        %589 = sbr.rel (%p587) target = $region64
      $region63: #{full_model_forward.2} parent=55 // pred_region
        %p590 = scmp.lt.s32.totalorder %s24, 1
        %s591 = scalar_select %p590, %s24, 1
        %p592 = scmp.lt.s32.totalorder %s25, 1
        %s593 = scalar_select %p592, %s25, 1
        %s594 = smul.addr %s591, 2
        %s595 = sadd.s32 %s593, %s594
        %s596 = smul.addr %s595, 2
        %s597 = scalar_lea.vmem %s5, %s596
      $region64: #{full_model_forward.2} parent=55 // pred_fallthru
        _
      // Predicated region
      $region65: #{full_model_forward.2} parent=55 // pred_check
        %p598 = pneg %p208
      $region66: #{full_model_forward.2} parent=55 // pred_check_branch
        %600 = sbr.rel (%p598) target = $region68
      $region67: #{full_model_forward.2} parent=55 // pred_region
        %p601 = scmp.lt.s32.totalorder %s24, 1
        %s602 = scalar_select %p601, %s24, 1
        %s603 = smul.addr %s602, 2
        %s604 = smul.addr %s603, 8
        %s605 = scalar_lea.vmem %s6, %s604
      $region68: #{full_model_forward.2} parent=55 // pred_fallthru
        _
    $region56: #{full_model_forward.2} parent=5 // pred_fallthru
      _
  $region6: #{full_model_forward.2} parent=0 // loop_footer
    %s17 = sadd.s32 1, %s13
  $region7: #{full_model_forward.2} parent=0 // loop_footer_branch
    %12 = sbr.rel target = $region3
  $region8: #{full_model_forward.2} parent=0 // loop_exit
    _

</llo_original>
